<compile_context>
chip_gen: v5e
topology: v5e:2x2
jax: 0.10.0
libtpu: 0.0.40
codegen_flags: <defaults>
</compile_context>

<pallas_src>
import functools

import jax
import jax.numpy as jnp
from jax.experimental import pallas as pl
from jax.experimental.pallas import tpu as pltpu


def _choose_tb(n1, n2, d, itemsize):
    """Per-step user-row tile: lane friendly (multiple of 128 when possible),
    sublane aligned, sized against a conservative VMEM budget (fits v7x)."""
    budget = 12 * 1024 * 1024                       # 2 tables x 2 pipeline buffers
    cap = budget // max(1, 4 * d * itemsize)
    cap = max(128, (cap // 128) * 128)
    cap = min(cap, 2048)
    n_min = min(n1, n2)
    if n_min >= 128:
        return min(cap, (n_min // 128) * 128)
    if n_min >= 8:
        return (n_min // 8) * 8
    # TODO(synk): tables with < 8 rows would need wrapper-side padding for the
    # sublane-alignment rule; not hit at the shapes exercised here.
    return n_min


def _fused_clustering_kernel(u1_ref, u2_ref, c_ref, ov1_ref, ov2_ref,
                             lida_ref, lclu_ref, lovl_ref,
                             dsum1_ref, dsum2_ref, mins1_ref, mins2_ref,
                             *, n1, n2, nblk1, nblk2, tb, k, m):
    i = pl.program_id(0)

    @pl.when(i == 0)
    def _init():
        dsum1_ref[...] = jnp.zeros_like(dsum1_ref)
        dsum2_ref[...] = jnp.zeros_like(dsum2_ref)
        mins1_ref[...] = jnp.zeros_like(mins1_ref)
        mins2_ref[...] = jnp.zeros_like(mins2_ref)

    c_nat = c_ref[...]                                   # (K, D) native dtype
    cf = c_nat.astype(jnp.float32)
    cf2 = cf * cf
    csq_col = jnp.sum(cf2, axis=1, keepdims=True)        # (K, 1)
    d_feat = c_nat.shape[1]
    ones_row = jnp.ones((1, d_feat), jnp.float32)

    def process(u_ref, n_valid, blk, dsum_ref, mins_ref):
        u = u_ref[...]                                   # (TB, D) native dtype
        uf = u.astype(jnp.float32)                       # in-register upcast
        # ||u||^2 as a lane-major (1, TB) row via a ones-vector matmul: keeps the
        # whole distance pipeline in the (K, TB) layout (no relayout/transpose).
        u_sq = jax.lax.dot_general(ones_row, uf * uf, (((1,), (1,)), ((), ())),
                                   preferred_element_type=jnp.float32)  # (1, TB)
        if u.dtype == c_nat.dtype:
            lhs, rhs = c_nat, u                          # bf16 feeds MXU directly
        else:
            lhs, rhs = cf, uf
        cross = jax.lax.dot_general(lhs, rhs, (((1,), (1,)), ((), ())),
                                    preferred_element_type=jnp.float32)  # (K, TB)
        d2 = jnp.maximum(csq_col + u_sq - 2.0 * cross, 0.0)              # (K, TB)
        dist = jnp.sqrt(d2)
        # NaN-safe masking of out-of-range rows (edge blocks are NOT padded).
        lane = jax.lax.broadcasted_iota(jnp.int32, (1, tb), 1)
        valid = (blk * tb + lane) < n_valid                               # (1, TB)
        dsum_ref[...] += jnp.where(valid, dist, 0.0)      # lane-partial column sum
        min_d2 = jnp.min(d2, axis=0, keepdims=True)                       # (1, TB)
        mins_ref[...] += jnp.where(valid, min_d2, 0.0)    # lane-partial min-d^2 sum

    @pl.when(i < nblk1)
    def _table1():
        process(u1_ref, n1, i, dsum1_ref, mins1_ref)

    @pl.when(i >= nblk1)
    def _table2():
        process(u2_ref, n2, i - nblk1, dsum2_ref, mins2_ref)

    @pl.when(i == nblk1 + nblk2 - 1)
    def _epilogue():
        # ---- L_IDA -------------------------------------------------------
        def norm01(colsum):
            lo = jnp.min(colsum, keepdims=True)
            hi = jnp.max(colsum, keepdims=True)
            return (colsum - lo) / (hi - lo + 1e-5)

        cs1 = jnp.sum(dsum1_ref[...], axis=1, keepdims=True)            # (K, 1)
        cs2 = jnp.sum(dsum2_ref[...], axis=1, keepdims=True)
        pq = norm01(cs1) - norm01(cs2)
        lida_ref[...] = jnp.sqrt(jnp.sum(pq * pq, keepdims=True))

        # ---- L_cluster -----------------------------------------------------
        cross_cc = jax.lax.dot_general(cf, cf, (((1,), (1,)), ((), ())),
                                       preferred_element_type=jnp.float32)  # (K, K)
        csq_row = jax.lax.dot_general(ones_row, cf2, (((1,), (1,)), ((), ())),
                                      preferred_element_type=jnp.float32)   # (1, K)
        d2_cc = jnp.maximum(csq_col + csq_row - 2.0 * cross_cc, 0.0)
        ri = jax.lax.broadcasted_iota(jnp.int32, (k, k), 0)
        ci = jax.lax.broadcasted_iota(jnp.int32, (k, k), 1)
        # NOTE: K == 1 divides by zero here, matching the PyTorch reference.
        term1 = jnp.sum(jnp.where(ri != ci, d2_cc, 0.0),
                        keepdims=True) / (k * (k - 1))
        term2 = (jnp.sum(mins1_ref[...], keepdims=True)
                 + jnp.sum(mins2_ref[...], keepdims=True)) / (n1 + n2)
        lclu_ref[...] = term1 + term2 / k

        # ---- L_overlap ------------------------------------------------------
        diff = ov1_ref[...].astype(jnp.float32) - ov2_ref[...].astype(jnp.float32)
        row_norm = jnp.sqrt(jnp.sum(diff * diff, axis=1, keepdims=True))  # (M, 1)
        lovl_ref[...] = jnp.sum(row_norm, keepdims=True) / m


@jax.jit
def clustering_module_forward(user_embeddings1, user_embeddings2,
                              cluster_centers, overlap_indices1,
                              overlap_indices2):
    n1, d = user_embeddings1.shape
    n2 = user_embeddings2.shape[0]
    k = cluster_centers.shape[0]

    # TODO(synk): the overlap row gather (emb[idx]) stays in the wrapper as an
    # XLA gather feeding small resident (M, D) blocks; for large M replace it
    # with scalar-prefetched indices + pl.Element(1) row BlockSpecs.
    ov1 = jnp.take(user_embeddings1, overlap_indices1.astype(jnp.int32), axis=0)
    ov2 = jnp.take(user_embeddings2, overlap_indices2.astype(jnp.int32), axis=0)
    m = ov1.shape[0]

    itemsize = user_embeddings1.dtype.itemsize
    tb = _choose_tb(n1, n2, d, itemsize)
    nblk1 = pl.cdiv(n1, tb)
    nblk2 = pl.cdiv(n2, tb)
    grid = (nblk1 + nblk2,)

    kernel = functools.partial(
        _fused_clustering_kernel,
        n1=n1, n2=n2, nblk1=nblk1, nblk2=nblk2, tb=tb, k=k, m=m)

    need_vmem = (4 * tb * d * itemsize                     # 2 tables x 2 buffers
                 + 2 * (k * d + 2 * m * d) * itemsize      # centers + overlap blocks
                 + (2 * k * tb + 2 * tb) * 4               # scratch accumulators
                 + (2 << 20))
    vmem_limit = int(min(64 << 20, max(32 << 20, 2 * need_vmem)))

    cost = pl.CostEstimate(
        flops=2 * (n1 + n2) * k * d + 2 * (n1 + n2) * d + 2 * k * k * d
        + 8 * (n1 + n2) * k,
        transcendentals=(n1 + n2) * k + m,
        bytes_accessed=itemsize * (n1 + n2 + 2 * m) * d + 4 * k * d + 12,
    )

    lida, lclu, lovl = pl.pallas_call(
        kernel,
        out_shape=(jax.ShapeDtypeStruct((1, 1), jnp.float32),
                   jax.ShapeDtypeStruct((1, 1), jnp.float32),
                   jax.ShapeDtypeStruct((1, 1), jnp.float32)),
        grid_spec=pltpu.PrefetchScalarGridSpec(
            num_scalar_prefetch=0,
            grid=grid,
            in_specs=[
                # Table-1 rows: advance during the first nblk1 steps, then hold
                # (unchanged block index => no re-DMA).
                pl.BlockSpec((tb, d), lambda i: (jnp.minimum(i, nblk1 - 1), 0)),
                # Table-2 rows: hold block 0 until step nblk1, then advance.
                pl.BlockSpec((tb, d), lambda i: (jnp.maximum(i - nblk1, 0), 0)),
                pl.BlockSpec((k, d), lambda i: (0, 0)),   # centers (resident)
                pl.BlockSpec((m, d), lambda i: (0, 0)),   # overlap rows 1 (resident)
                pl.BlockSpec((m, d), lambda i: (0, 0)),   # overlap rows 2 (resident)
            ],
            out_specs=[
                pl.BlockSpec((1, 1), lambda i: (0, 0)),   # L_IDA
                pl.BlockSpec((1, 1), lambda i: (0, 0)),   # L_cluster
                pl.BlockSpec((1, 1), lambda i: (0, 0)),   # L_overlap
            ],
            scratch_shapes=[
                pltpu.VMEM((k, tb), jnp.float32),   # lane-partial colsum, table 1
                pltpu.VMEM((k, tb), jnp.float32),   # lane-partial colsum, table 2
                pltpu.VMEM((1, tb), jnp.float32),   # lane-partial min-d^2, table 1
                pltpu.VMEM((1, tb), jnp.float32),   # lane-partial min-d^2, table 2
            ],
        ),
        compiler_params=pltpu.CompilerParams(
            dimension_semantics=("arbitrary",),   # resident accumulators -> sequential
            vmem_limit_bytes=vmem_limit),
        cost_estimate=cost,
    )(user_embeddings1, user_embeddings2, cluster_centers, ov1, ov2)

    return lida[0, 0], lclu[0, 0], lovl[0, 0]


if __name__ == "__main__":
    K, D = 8, 32
    N1, N2, M = 96, 80, 16

    key = jax.random.PRNGKey(0)
    k1, k2, k3, k4, k5 = jax.random.split(key, 5)
    ue1 = jax.random.normal(k1, (N1, D), dtype=jnp.float32)
    ue2 = jax.random.normal(k2, (N2, D), dtype=jnp.float32)
    centers = jax.random.normal(k3, (K, D), dtype=jnp.float32)
    idx1 = jax.random.randint(k4, (M,), 0, N1, dtype=jnp.int32)
    idx2 = jax.random.randint(k5, (M,), 0, N2, dtype=jnp.int32)

    l_ida, l_cluster, l_overlap = jax.block_until_ready(
        clustering_module_forward(ue1, ue2, centers, idx1, idx2))

    # Pure-JAX reference (mirrors the PyTorch forward).
    def cdist(x, y):
        return jnp.sqrt(jnp.maximum(
            jnp.sum((x[:, None, :] - y[None, :, :]) ** 2, axis=-1), 0.0))

    cs1 = cdist(ue1, centers).sum(0)
    cs2 = cdist(ue2, centers).sum(0)
    P = (cs1 - cs1.min()) / (cs1.max() - cs1.min() + 1e-5)
    Q = (cs2 - cs2.min()) / (cs2.max() - cs2.min() + 1e-5)
    l_ida_ref = jnp.sqrt(jnp.sum((P - Q) ** 2))

    dcc = cdist(centers, centers) ** 2
    mask = 1.0 - jnp.eye(K)
    term1_ref = (dcc * mask).sum() / (K * (K - 1))
    ue = jnp.concatenate([ue1, ue2], axis=0)
    term2_ref = (cdist(ue, centers) ** 2).min(axis=1).sum() / ue.shape[0]
    l_cluster_ref = term1_ref + term2_ref / K

    o1, o2 = ue1[idx1], ue2[idx2]
    l_overlap_ref = jnp.sqrt(jnp.sum((o1 - o2) ** 2, axis=1)).mean()

    assert jnp.allclose(l_ida, l_ida_ref, atol=1e-3, rtol=1e-3), (l_ida, l_ida_ref)
    assert jnp.allclose(l_cluster, l_cluster_ref, atol=1e-3, rtol=1e-3), (
        l_cluster, l_cluster_ref)
    assert jnp.allclose(l_overlap, l_overlap_ref, atol=1e-3, rtol=1e-3), (
        l_overlap, l_overlap_ref)

    print("KERNEL_OK")
</pallas_src>

<mosaic_0001>
module attributes {stable_mosaic.version = 11 : i64} {
  func.func @_fused_clustering_kernel(%arg0: i32, %arg1: memref<80x32xf32, #tpu.memory_space<vmem>>, %arg2: memref<80x32xf32, #tpu.memory_space<vmem>>, %arg3: memref<8x32xf32, #tpu.memory_space<vmem>>, %arg4: memref<16x32xf32, #tpu.memory_space<vmem>>, %arg5: memref<16x32xf32, #tpu.memory_space<vmem>>, %arg6: memref<1x1xf32, #tpu.memory_space<vmem>>, %arg7: memref<1x1xf32, #tpu.memory_space<vmem>>, %arg8: memref<1x1xf32, #tpu.memory_space<vmem>>, %arg9: memref<8x80xf32, #tpu.memory_space<vmem>>, %arg10: memref<8x80xf32, #tpu.memory_space<vmem>>, %arg11: memref<1x80xf32, #tpu.memory_space<vmem>>, %arg12: memref<1x80xf32, #tpu.memory_space<vmem>>) attributes {dimension_semantics = [#tpu.dimension_semantics<arbitrary>], iteration_bounds = array<i64: 3>, scalar_prefetch = 0 : i64, scratch_operands = 4 : i64, tpu.core_type = #tpu.core_type<tc>, window_params = [{transform_indices = @transform_0, window_bounds = array<i64: 80, 32>}, {transform_indices = @transform_1, window_bounds = array<i64: 80, 32>}, {pipeline_mode = #tpu.pipeline_mode<synchronous>, transform_indices = @transform_2, window_bounds = array<i64: 8, 32>}, {pipeline_mode = #tpu.pipeline_mode<synchronous>, transform_indices = @transform_3, window_bounds = array<i64: 16, 32>}, {pipeline_mode = #tpu.pipeline_mode<synchronous>, transform_indices = @transform_4, window_bounds = array<i64: 16, 32>}, {pipeline_mode = #tpu.pipeline_mode<synchronous>, transform_indices = @transform_5, window_bounds = array<i64: 1, 1>}, {pipeline_mode = #tpu.pipeline_mode<synchronous>, transform_indices = @transform_6, window_bounds = array<i64: 1, 1>}, {pipeline_mode = #tpu.pipeline_mode<synchronous>, transform_indices = @transform_7, window_bounds = array<i64: 1, 1>}]} {
    %c0_i32 = arith.constant 0 : i32
    %0 = arith.cmpi eq, %arg0, %c0_i32 : i32
    %1 = arith.extui %0 : i1 to i32
    %c0_i32_0 = arith.constant 0 : i32
    %2 = arith.cmpi ne, %1, %c0_i32_0 : i32
    scf.if %2 {
      %cst_8 = arith.constant 0.000000e+00 : f32
      %17 = vector.broadcast %cst_8 : f32 to vector<8x80xf32>
      %c0_9 = arith.constant 0 : index
      %c0_10 = arith.constant 0 : index
      %18 = vector.load %arg9[%c0_9, %c0_10] : memref<8x80xf32, #tpu.memory_space<vmem>>, vector<8x80xf32>
      tpu.vector_store %arg9[%c0_9, %c0_10], %17 {strides = array<i32>} : memref<8x80xf32, #tpu.memory_space<vmem>>, vector<8x80xf32>,
      %cst_11 = arith.constant 0.000000e+00 : f32
      %19 = vector.broadcast %cst_11 : f32 to vector<8x80xf32>
      %c0_12 = arith.constant 0 : index
      %c0_13 = arith.constant 0 : index
      %20 = vector.load %arg10[%c0_12, %c0_13] : memref<8x80xf32, #tpu.memory_space<vmem>>, vector<8x80xf32>
      tpu.vector_store %arg10[%c0_12, %c0_13], %19 {strides = array<i32>} : memref<8x80xf32, #tpu.memory_space<vmem>>, vector<8x80xf32>,
      %cst_14 = arith.constant 0.000000e+00 : f32
      %21 = vector.broadcast %cst_14 : f32 to vector<1x80xf32>
      %c0_15 = arith.constant 0 : index
      %c0_16 = arith.constant 0 : index
      %22 = vector.load %arg11[%c0_15, %c0_16] : memref<1x80xf32, #tpu.memory_space<vmem>>, vector<1x80xf32>
      tpu.vector_store %arg11[%c0_15, %c0_16], %21 {strides = array<i32>} : memref<1x80xf32, #tpu.memory_space<vmem>>, vector<1x80xf32>,
      %cst_17 = arith.constant 0.000000e+00 : f32
      %23 = vector.broadcast %cst_17 : f32 to vector<1x80xf32>
      %c0_18 = arith.constant 0 : index
      %c0_19 = arith.constant 0 : index
      %24 = vector.load %arg12[%c0_18, %c0_19] : memref<1x80xf32, #tpu.memory_space<vmem>>, vector<1x80xf32>
      tpu.vector_store %arg12[%c0_18, %c0_19], %23 {strides = array<i32>} : memref<1x80xf32, #tpu.memory_space<vmem>>, vector<1x80xf32>,
    } else {
    }
    %c0 = arith.constant 0 : index
    %c0_1 = arith.constant 0 : index
    %3 = vector.load %arg3[%c0, %c0_1] : memref<8x32xf32, #tpu.memory_space<vmem>>, vector<8x32xf32>
    %4 = arith.mulf %3, %3 : vector<8x32xf32>
    %cst = arith.constant dense<0.000000e+00> : vector<8xf32>
    %5 = vector.multi_reduction <add>, %4, %cst [1] : vector<8x32xf32> to vector<8xf32>
    %6 = vector.shape_cast %5 : vector<8xf32> to vector<8x1xf32>
    %cst_2 = arith.constant 1.000000e+00 : f32
    %7 = vector.broadcast %cst_2 : f32 to vector<1x32xf32>
    %c2_i32 = arith.constant 2 : i32
    %8 = arith.cmpi slt, %arg0, %c2_i32 : i32
    %9 = arith.extui %8 : i1 to i32
    %c0_i32_3 = arith.constant 0 : i32
    %10 = arith.cmpi ne, %9, %c0_i32_3 : i32
    scf.if %10 {
      %c0_8 = arith.constant 0 : index
      %c0_9 = arith.constant 0 : index
      %17 = vector.load %arg1[%c0_8, %c0_9] : memref<80x32xf32, #tpu.memory_space<vmem>>, vector<80x32xf32>
      %18 = arith.mulf %17, %17 : vector<80x32xf32>
      %cst_10 = arith.constant dense<0.000000e+00> : vector<1x80xf32>
      %19 = tpu.matmul %7, %18, %cst_10 {dimension_numbers = #tpu.dot_dimension_numbers<[1], [1], [0], [0], [0, 0, 1, 0], [], []>} : vector<1x32xf32>, vector<80x32xf32>, vector<1x80xf32> -> vector<1x80xf32>
      %cst_11 = arith.constant dense<0.000000e+00> : vector<8x80xf32>
      %20 = tpu.matmul %3, %17, %cst_11 {dimension_numbers = #tpu.dot_dimension_numbers<[1], [1], [0], [0], [0, 0, 1, 0], [], []>} : vector<8x32xf32>, vector<80x32xf32>, vector<8x80xf32> -> vector<8x80xf32>
      %21 = vector.broadcast %6 : vector<8x1xf32> to vector<8x80xf32>
      %22 = vector.broadcast %19 : vector<1x80xf32> to vector<8x80xf32>
      %23 = arith.addf %21, %22 : vector<8x80xf32>
      %cst_12 = arith.constant 2.000000e+00 : f32
      %24 = vector.broadcast %cst_12 : f32 to vector<8x80xf32>
      %25 = arith.mulf %24, %20 : vector<8x80xf32>
      %26 = arith.subf %23, %25 : vector<8x80xf32>
      %cst_13 = arith.constant 0.000000e+00 : f32
      %27 = vector.broadcast %cst_13 : f32 to vector<8x80xf32>
      %28 = arith.maximumf %26, %27 : vector<8x80xf32>
      %29 = math.sqrt %28 : vector<8x80xf32>
      %30 = tpu.iota {dimensions = array<i32: 1>} : vector<1x80xi32>
      %c80_i32 = arith.constant 80 : i32
      %31 = arith.muli %arg0, %c80_i32 : i32
      %32 = vector.broadcast %31 : i32 to vector<1x80xi32>
      %33 = arith.addi %32, %30 : vector<1x80xi32>
      %c96_i32 = arith.constant 96 : i32
      %34 = vector.broadcast %c96_i32 : i32 to vector<1x80xi32>
      %35 = arith.cmpi slt, %33, %34 : vector<1x80xi32>
      %c0_14 = arith.constant 0 : index
      %c0_15 = arith.constant 0 : index
      %36 = vector.load %arg9[%c0_14, %c0_15] : memref<8x80xf32, #tpu.memory_space<vmem>>, vector<8x80xf32>
      %cst_16 = arith.constant 0.000000e+00 : f32
      %37 = vector.shape_cast %35 : vector<1x80xi1> to vector<1x80xi1>
      %38 = vector.broadcast %37 : vector<1x80xi1> to vector<8x80xi1>
      %39 = vector.broadcast %cst_16 : f32 to vector<8x80xf32>
      %40 = arith.select %38, %29, %39 : vector<8x80xi1>, vector<8x80xf32>
      %41 = arith.addf %36, %40 : vector<8x80xf32>
      %c0_17 = arith.constant 0 : index
      %c0_18 = arith.constant 0 : index
      %42 = vector.load %arg9[%c0_17, %c0_18] : memref<8x80xf32, #tpu.memory_space<vmem>>, vector<8x80xf32>
      tpu.vector_store %arg9[%c0_17, %c0_18], %41 {strides = array<i32>} : memref<8x80xf32, #tpu.memory_space<vmem>>, vector<8x80xf32>,
      %cst_19 = arith.constant dense<0x7F800000> : vector<80xf32>
      %43 = vector.multi_reduction <minimumf>, %28, %cst_19 [0] : vector<8x80xf32> to vector<80xf32>
      %44 = vector.shape_cast %43 : vector<80xf32> to vector<1x80xf32>
      %c0_20 = arith.constant 0 : index
      %c0_21 = arith.constant 0 : index
      %45 = vector.load %arg11[%c0_20, %c0_21] : memref<1x80xf32, #tpu.memory_space<vmem>>, vector<1x80xf32>
      %cst_22 = arith.constant 0.000000e+00 : f32
      %46 = vector.broadcast %cst_22 : f32 to vector<1x80xf32>
      %47 = arith.select %35, %44, %46 : vector<1x80xi1>, vector<1x80xf32>
      %48 = arith.addf %45, %47 : vector<1x80xf32>
      %c0_23 = arith.constant 0 : index
      %c0_24 = arith.constant 0 : index
      %49 = vector.load %arg11[%c0_23, %c0_24] : memref<1x80xf32, #tpu.memory_space<vmem>>, vector<1x80xf32>
      tpu.vector_store %arg11[%c0_23, %c0_24], %48 {strides = array<i32>} : memref<1x80xf32, #tpu.memory_space<vmem>>, vector<1x80xf32>,
    } else {
    }
    %c2_i32_4 = arith.constant 2 : i32
    %11 = arith.cmpi sge, %arg0, %c2_i32_4 : i32
    %12 = arith.extui %11 : i1 to i32
    %c0_i32_5 = arith.constant 0 : i32
    %13 = arith.cmpi ne, %12, %c0_i32_5 : i32
    scf.if %13 {
      %c2_i32_8 = arith.constant 2 : i32
      %17 = arith.subi %arg0, %c2_i32_8 : i32
      %c0_9 = arith.constant 0 : index
      %c0_10 = arith.constant 0 : index
      %18 = vector.load %arg2[%c0_9, %c0_10] : memref<80x32xf32, #tpu.memory_space<vmem>>, vector<80x32xf32>
      %19 = arith.mulf %18, %18 : vector<80x32xf32>
      %cst_11 = arith.constant dense<0.000000e+00> : vector<1x80xf32>
      %20 = tpu.matmul %7, %19, %cst_11 {dimension_numbers = #tpu.dot_dimension_numbers<[1], [1], [0], [0], [0, 0, 1, 0], [], []>} : vector<1x32xf32>, vector<80x32xf32>, vector<1x80xf32> -> vector<1x80xf32>
      %cst_12 = arith.constant dense<0.000000e+00> : vector<8x80xf32>
      %21 = tpu.matmul %3, %18, %cst_12 {dimension_numbers = #tpu.dot_dimension_numbers<[1], [1], [0], [0], [0, 0, 1, 0], [], []>} : vector<8x32xf32>, vector<80x32xf32>, vector<8x80xf32> -> vector<8x80xf32>
      %22 = vector.broadcast %6 : vector<8x1xf32> to vector<8x80xf32>
      %23 = vector.broadcast %20 : vector<1x80xf32> to vector<8x80xf32>
      %24 = arith.addf %22, %23 : vector<8x80xf32>
      %cst_13 = arith.constant 2.000000e+00 : f32
      %25 = vector.broadcast %cst_13 : f32 to vector<8x80xf32>
      %26 = arith.mulf %25, %21 : vector<8x80xf32>
      %27 = arith.subf %24, %26 : vector<8x80xf32>
      %cst_14 = arith.constant 0.000000e+00 : f32
      %28 = vector.broadcast %cst_14 : f32 to vector<8x80xf32>
      %29 = arith.maximumf %27, %28 : vector<8x80xf32>
      %30 = math.sqrt %29 : vector<8x80xf32>
      %31 = tpu.iota {dimensions = array<i32: 1>} : vector<1x80xi32>
      %c80_i32 = arith.constant 80 : i32
      %32 = arith.muli %17, %c80_i32 : i32
      %33 = vector.broadcast %32 : i32 to vector<1x80xi32>
      %34 = arith.addi %33, %31 : vector<1x80xi32>
      %c80_i32_15 = arith.constant 80 : i32
      %35 = vector.broadcast %c80_i32_15 : i32 to vector<1x80xi32>
      %36 = arith.cmpi slt, %34, %35 : vector<1x80xi32>
      %c0_16 = arith.constant 0 : index
      %c0_17 = arith.constant 0 : index
      %37 = vector.load %arg10[%c0_16, %c0_17] : memref<8x80xf32, #tpu.memory_space<vmem>>, vector<8x80xf32>
      %cst_18 = arith.constant 0.000000e+00 : f32
      %38 = vector.shape_cast %36 : vector<1x80xi1> to vector<1x80xi1>
      %39 = vector.broadcast %38 : vector<1x80xi1> to vector<8x80xi1>
      %40 = vector.broadcast %cst_18 : f32 to vector<8x80xf32>
      %41 = arith.select %39, %30, %40 : vector<8x80xi1>, vector<8x80xf32>
      %42 = arith.addf %37, %41 : vector<8x80xf32>
      %c0_19 = arith.constant 0 : index
      %c0_20 = arith.constant 0 : index
      %43 = vector.load %arg10[%c0_19, %c0_20] : memref<8x80xf32, #tpu.memory_space<vmem>>, vector<8x80xf32>
      tpu.vector_store %arg10[%c0_19, %c0_20], %42 {strides = array<i32>} : memref<8x80xf32, #tpu.memory_space<vmem>>, vector<8x80xf32>,
      %cst_21 = arith.constant dense<0x7F800000> : vector<80xf32>
      %44 = vector.multi_reduction <minimumf>, %29, %cst_21 [0] : vector<8x80xf32> to vector<80xf32>
      %45 = vector.shape_cast %44 : vector<80xf32> to vector<1x80xf32>
      %c0_22 = arith.constant 0 : index
      %c0_23 = arith.constant 0 : index
      %46 = vector.load %arg12[%c0_22, %c0_23] : memref<1x80xf32, #tpu.memory_space<vmem>>, vector<1x80xf32>
      %cst_24 = arith.constant 0.000000e+00 : f32
      %47 = vector.broadcast %cst_24 : f32 to vector<1x80xf32>
      %48 = arith.select %36, %45, %47 : vector<1x80xi1>, vector<1x80xf32>
      %49 = arith.addf %46, %48 : vector<1x80xf32>
      %c0_25 = arith.constant 0 : index
      %c0_26 = arith.constant 0 : index
      %50 = vector.load %arg12[%c0_25, %c0_26] : memref<1x80xf32, #tpu.memory_space<vmem>>, vector<1x80xf32>
      tpu.vector_store %arg12[%c0_25, %c0_26], %49 {strides = array<i32>} : memref<1x80xf32, #tpu.memory_space<vmem>>, vector<1x80xf32>,
    } else {
    }
    %c2_i32_6 = arith.constant 2 : i32
    %14 = arith.cmpi eq, %arg0, %c2_i32_6 : i32
    %15 = arith.extui %14 : i1 to i32
    %c0_i32_7 = arith.constant 0 : i32
    %16 = arith.cmpi ne, %15, %c0_i32_7 : i32
    scf.if %16 {
      %c0_8 = arith.constant 0 : index
      %c0_9 = arith.constant 0 : index
      %17 = vector.load %arg9[%c0_8, %c0_9] : memref<8x80xf32, #tpu.memory_space<vmem>>, vector<8x80xf32>
      %cst_10 = arith.constant dense<0.000000e+00> : vector<8xf32>
      %18 = vector.multi_reduction <add>, %17, %cst_10 [1] : vector<8x80xf32> to vector<8xf32>
      %19 = vector.shape_cast %18 : vector<8xf32> to vector<8x1xf32>
      %c0_11 = arith.constant 0 : index
      %c0_12 = arith.constant 0 : index
      %20 = vector.load %arg10[%c0_11, %c0_12] : memref<8x80xf32, #tpu.memory_space<vmem>>, vector<8x80xf32>
      %cst_13 = arith.constant dense<0.000000e+00> : vector<8xf32>
      %21 = vector.multi_reduction <add>, %20, %cst_13 [1] : vector<8x80xf32> to vector<8xf32>
      %22 = vector.shape_cast %21 : vector<8xf32> to vector<8x1xf32>
      %23 = vector.shape_cast %19 : vector<8x1xf32> to vector<1x8x1xf32>
      %cst_14 = arith.constant dense<0x7F800000> : vector<1xf32>
      %24 = vector.multi_reduction <minimumf>, %23, %cst_14 [1, 2] : vector<1x8x1xf32> to vector<1xf32>
      %25 = vector.shape_cast %24 : vector<1xf32> to vector<1x1x1xf32>
      %26 = vector.extract %25[0, 0, 0] : f32 from vector<1x1x1xf32>
      %27 = vector.broadcast %26 : f32 to vector<1x1xf32>
      %28 = vector.shape_cast %19 : vector<8x1xf32> to vector<1x8x1xf32>
      %cst_15 = arith.constant dense<0xFF800000> : vector<1xf32>
      %29 = vector.multi_reduction <maximumf>, %28, %cst_15 [1, 2] : vector<1x8x1xf32> to vector<1xf32>
      %30 = vector.shape_cast %29 : vector<1xf32> to vector<1x1x1xf32>
      %31 = vector.extract %30[0, 0, 0] : f32 from vector<1x1x1xf32>
      %32 = vector.broadcast %31 : f32 to vector<1x1xf32>
      %33 = vector.broadcast %27 : vector<1x1xf32> to vector<8x1xf32>
      %34 = arith.subf %19, %33 : vector<8x1xf32>
      %35 = arith.subf %32, %27 : vector<1x1xf32>
      %cst_16 = arith.constant 9.99999974E-6 : f32
      %36 = vector.broadcast %cst_16 : f32 to vector<1x1xf32>
      %37 = arith.addf %35, %36 : vector<1x1xf32>
      %38 = vector.broadcast %37 : vector<1x1xf32> to vector<8x1xf32>
      %39 = arith.divf %34, %38 : vector<8x1xf32>
      %40 = vector.shape_cast %22 : vector<8x1xf32> to vector<1x8x1xf32>
      %cst_17 = arith.constant dense<0x7F800000> : vector<1xf32>
      %41 = vector.multi_reduction <minimumf>, %40, %cst_17 [1, 2] : vector<1x8x1xf32> to vector<1xf32>
      %42 = vector.shape_cast %41 : vector<1xf32> to vector<1x1x1xf32>
      %43 = vector.extract %42[0, 0, 0] : f32 from vector<1x1x1xf32>
      %44 = vector.broadcast %43 : f32 to vector<1x1xf32>
      %45 = vector.shape_cast %22 : vector<8x1xf32> to vector<1x8x1xf32>
      %cst_18 = arith.constant dense<0xFF800000> : vector<1xf32>
      %46 = vector.multi_reduction <maximumf>, %45, %cst_18 [1, 2] : vector<1x8x1xf32> to vector<1xf32>
      %47 = vector.shape_cast %46 : vector<1xf32> to vector<1x1x1xf32>
      %48 = vector.extract %47[0, 0, 0] : f32 from vector<1x1x1xf32>
      %49 = vector.broadcast %48 : f32 to vector<1x1xf32>
      %50 = vector.broadcast %44 : vector<1x1xf32> to vector<8x1xf32>
      %51 = arith.subf %22, %50 : vector<8x1xf32>
      %52 = arith.subf %49, %44 : vector<1x1xf32>
      %cst_19 = arith.constant 9.99999974E-6 : f32
      %53 = vector.broadcast %cst_19 : f32 to vector<1x1xf32>
      %54 = arith.addf %52, %53 : vector<1x1xf32>
      %55 = vector.broadcast %54 : vector<1x1xf32> to vector<8x1xf32>
      %56 = arith.divf %51, %55 : vector<8x1xf32>
      %57 = arith.subf %39, %56 : vector<8x1xf32>
      %58 = arith.mulf %57, %57 : vector<8x1xf32>
      %59 = vector.shape_cast %58 : vector<8x1xf32> to vector<1x8x1xf32>
      %cst_20 = arith.constant dense<0.000000e+00> : vector<1xf32>
      %60 = vector.multi_reduction <add>, %59, %cst_20 [1, 2] : vector<1x8x1xf32> to vector<1xf32>
      %61 = vector.shape_cast %60 : vector<1xf32> to vector<1x1x1xf32>
      %62 = vector.extract %61[0, 0, 0] : f32 from vector<1x1x1xf32>
      %63 = vector.broadcast %62 : f32 to vector<1x1xf32>
      %64 = math.sqrt %63 : vector<1x1xf32>
      %c0_21 = arith.constant 0 : index
      %c0_22 = arith.constant 0 : index
      %65 = vector.load %arg6[%c0_21, %c0_22] : memref<1x1xf32, #tpu.memory_space<vmem>>, vector<1x1xf32>
      tpu.vector_store %arg6[%c0_21, %c0_22], %64 {strides = array<i32>} : memref<1x1xf32, #tpu.memory_space<vmem>>, vector<1x1xf32>,
      %cst_23 = arith.constant dense<0.000000e+00> : vector<8x8xf32>
      %66 = tpu.matmul %3, %3, %cst_23 {dimension_numbers = #tpu.dot_dimension_numbers<[1], [1], [0], [0], [0, 0, 1, 0], [], []>} : vector<8x32xf32>, vector<8x32xf32>, vector<8x8xf32> -> vector<8x8xf32>
      %cst_24 = arith.constant dense<0.000000e+00> : vector<1x8xf32>
      %67 = tpu.matmul %7, %4, %cst_24 {dimension_numbers = #tpu.dot_dimension_numbers<[1], [1], [0], [0], [0, 0, 1, 0], [], []>} : vector<1x32xf32>, vector<8x32xf32>, vector<1x8xf32> -> vector<1x8xf32>
      %68 = vector.broadcast %6 : vector<8x1xf32> to vector<8x8xf32>
      %69 = vector.broadcast %67 : vector<1x8xf32> to vector<8x8xf32>
      %70 = arith.addf %68, %69 : vector<8x8xf32>
      %cst_25 = arith.constant 2.000000e+00 : f32
      %71 = vector.broadcast %cst_25 : f32 to vector<8x8xf32>
      %72 = arith.mulf %71, %66 : vector<8x8xf32>
      %73 = arith.subf %70, %72 : vector<8x8xf32>
      %cst_26 = arith.constant 0.000000e+00 : f32
      %74 = vector.broadcast %cst_26 : f32 to vector<8x8xf32>
      %75 = arith.maximumf %73, %74 : vector<8x8xf32>
      %76 = tpu.iota {dimensions = array<i32: 0>} : vector<8x8xi32>
      %77 = tpu.iota {dimensions = array<i32: 1>} : vector<8x8xi32>
      %78 = arith.cmpi ne, %76, %77 : vector<8x8xi32>
      %cst_27 = arith.constant 0.000000e+00 : f32
      %79 = vector.broadcast %cst_27 : f32 to vector<8x8xf32>
      %80 = arith.select %78, %75, %79 : vector<8x8xi1>, vector<8x8xf32>
      %81 = vector.shape_cast %80 : vector<8x8xf32> to vector<1x8x8xf32>
      %cst_28 = arith.constant dense<0.000000e+00> : vector<1xf32>
      %82 = vector.multi_reduction <add>, %81, %cst_28 [1, 2] : vector<1x8x8xf32> to vector<1xf32>
      %83 = vector.shape_cast %82 : vector<1xf32> to vector<1x1x1xf32>
      %84 = vector.extract %83[0, 0, 0] : f32 from vector<1x1x1xf32>
      %85 = vector.broadcast %84 : f32 to vector<1x1xf32>
      %cst_29 = arith.constant 5.600000e+01 : f32
      %86 = vector.broadcast %cst_29 : f32 to vector<1x1xf32>
      %87 = arith.divf %85, %86 : vector<1x1xf32>
      %c0_30 = arith.constant 0 : index
      %c0_31 = arith.constant 0 : index
      %88 = vector.load %arg11[%c0_30, %c0_31] : memref<1x80xf32, #tpu.memory_space<vmem>>, vector<1x80xf32>
      %89 = vector.shape_cast %88 : vector<1x80xf32> to vector<1x1x80xf32>
      %cst_32 = arith.constant dense<0.000000e+00> : vector<1xf32>
      %90 = vector.multi_reduction <add>, %89, %cst_32 [1, 2] : vector<1x1x80xf32> to vector<1xf32>
      %91 = vector.shape_cast %90 : vector<1xf32> to vector<1x1x1xf32>
      %92 = vector.extract %91[0, 0, 0] : f32 from vector<1x1x1xf32>
      %93 = vector.broadcast %92 : f32 to vector<1x1xf32>
      %c0_33 = arith.constant 0 : index
      %c0_34 = arith.constant 0 : index
      %94 = vector.load %arg12[%c0_33, %c0_34] : memref<1x80xf32, #tpu.memory_space<vmem>>, vector<1x80xf32>
      %95 = vector.shape_cast %94 : vector<1x80xf32> to vector<1x1x80xf32>
      %cst_35 = arith.constant dense<0.000000e+00> : vector<1xf32>
      %96 = vector.multi_reduction <add>, %95, %cst_35 [1, 2] : vector<1x1x80xf32> to vector<1xf32>
      %97 = vector.shape_cast %96 : vector<1xf32> to vector<1x1x1xf32>
      %98 = vector.extract %97[0, 0, 0] : f32 from vector<1x1x1xf32>
      %99 = vector.broadcast %98 : f32 to vector<1x1xf32>
      %100 = arith.addf %93, %99 : vector<1x1xf32>
      %cst_36 = arith.constant 1.760000e+02 : f32
      %101 = vector.broadcast %cst_36 : f32 to vector<1x1xf32>
      %102 = arith.divf %100, %101 : vector<1x1xf32>
      %cst_37 = arith.constant 8.000000e+00 : f32
      %103 = vector.broadcast %cst_37 : f32 to vector<1x1xf32>
      %104 = arith.divf %102, %103 : vector<1x1xf32>
      %105 = arith.addf %87, %104 : vector<1x1xf32>
      %c0_38 = arith.constant 0 : index
      %c0_39 = arith.constant 0 : index
      %106 = vector.load %arg7[%c0_38, %c0_39] : memref<1x1xf32, #tpu.memory_space<vmem>>, vector<1x1xf32>
      tpu.vector_store %arg7[%c0_38, %c0_39], %105 {strides = array<i32>} : memref<1x1xf32, #tpu.memory_space<vmem>>, vector<1x1xf32>,
      %c0_40 = arith.constant 0 : index
      %c0_41 = arith.constant 0 : index
      %107 = vector.load %arg4[%c0_40, %c0_41] : memref<16x32xf32, #tpu.memory_space<vmem>>, vector<16x32xf32>
      %c0_42 = arith.constant 0 : index
      %c0_43 = arith.constant 0 : index
      %108 = vector.load %arg5[%c0_42, %c0_43] : memref<16x32xf32, #tpu.memory_space<vmem>>, vector<16x32xf32>
      %109 = arith.subf %107, %108 : vector<16x32xf32>
      %110 = arith.mulf %109, %109 : vector<16x32xf32>
      %cst_44 = arith.constant dense<0.000000e+00> : vector<16xf32>
      %111 = vector.multi_reduction <add>, %110, %cst_44 [1] : vector<16x32xf32> to vector<16xf32>
      %112 = vector.shape_cast %111 : vector<16xf32> to vector<16x1xf32>
      %113 = math.sqrt %112 : vector<16x1xf32>
      %114 = vector.shape_cast %113 : vector<16x1xf32> to vector<1x16x1xf32>
      %cst_45 = arith.constant dense<0.000000e+00> : vector<1xf32>
      %115 = vector.multi_reduction <add>, %114, %cst_45 [1, 2] : vector<1x16x1xf32> to vector<1xf32>
      %116 = vector.shape_cast %115 : vector<1xf32> to vector<1x1x1xf32>
      %117 = vector.extract %116[0, 0, 0] : f32 from vector<1x1x1xf32>
      %118 = vector.broadcast %117 : f32 to vector<1x1xf32>
      %cst_46 = arith.constant 1.600000e+01 : f32
      %119 = vector.broadcast %cst_46 : f32 to vector<1x1xf32>
      %120 = arith.divf %118, %119 : vector<1x1xf32>
      %c0_47 = arith.constant 0 : index
      %c0_48 = arith.constant 0 : index
      %121 = vector.load %arg8[%c0_47, %c0_48] : memref<1x1xf32, #tpu.memory_space<vmem>>, vector<1x1xf32>
      tpu.vector_store %arg8[%c0_47, %c0_48], %120 {strides = array<i32>} : memref<1x1xf32, #tpu.memory_space<vmem>>, vector<1x1xf32>,
    } else {
    }
    return
  }
  func.func @transform_0(%arg0: i32) -> (i32, i32) {
    %c1_i32 = arith.constant 1 : i32
    %0 = arith.minsi %arg0, %c1_i32 : i32
    %c0_i32 = arith.constant 0 : i32
    %c0_i32_0 = arith.constant 0 : i32
    return %0, %c0_i32 : i32, i32
  }
  func.func @transform_1(%arg0: i32) -> (i32, i32) {
    %c2_i32 = arith.constant 2 : i32
    %0 = arith.subi %arg0, %c2_i32 : i32
    %c0_i32 = arith.constant 0 : i32
    %1 = arith.maxsi %0, %c0_i32 : i32
    %c0_i32_0 = arith.constant 0 : i32
    %c0_i32_1 = arith.constant 0 : i32
    return %1, %c0_i32_0 : i32, i32
  }
  func.func @transform_2(%arg0: i32) -> (i32, i32) {
    %c0_i32 = arith.constant 0 : i32
    %c0_i32_0 = arith.constant 0 : i32
    %c0_i32_1 = arith.constant 0 : i32
    return %c0_i32, %c0_i32_0 : i32, i32
  }
  func.func @transform_3(%arg0: i32) -> (i32, i32) {
    %c0_i32 = arith.constant 0 : i32
    %c0_i32_0 = arith.constant 0 : i32
    %c0_i32_1 = arith.constant 0 : i32
    return %c0_i32, %c0_i32_0 : i32, i32
  }
  func.func @transform_4(%arg0: i32) -> (i32, i32) {
    %c0_i32 = arith.constant 0 : i32
    %c0_i32_0 = arith.constant 0 : i32
    %c0_i32_1 = arith.constant 0 : i32
    return %c0_i32, %c0_i32_0 : i32, i32
  }
  func.func @transform_5(%arg0: i32) -> (i32, i32) {
    %c0_i32 = arith.constant 0 : i32
    %c0_i32_0 = arith.constant 0 : i32
    %c0_i32_1 = arith.constant 0 : i32
    return %c0_i32, %c0_i32_0 : i32, i32
  }
  func.func @transform_6(%arg0: i32) -> (i32, i32) {
    %c0_i32 = arith.constant 0 : i32
    %c0_i32_0 = arith.constant 0 : i32
    %c0_i32_1 = arith.constant 0 : i32
    return %c0_i32, %c0_i32_0 : i32, i32
  }
  func.func @transform_7(%arg0: i32) -> (i32, i32) {
    %c0_i32 = arith.constant 0 : i32
    %c0_i32_0 = arith.constant 0 : i32
    %c0_i32_1 = arith.constant 0 : i32
    return %c0_i32, %c0_i32_0 : i32, i32
  }
}

</mosaic_0001>

<llo_original>
// kernel: clustering_module_forward.1
$region0: #{clustering_module_forward.1}
  #allocation0 [shape = 'u32[]', space=smem, size = 0x4, offset = 0x4, fixed_abs, tag = 'smem constant byte address 0x4 - core index']
  #allocation1 [shape = 'u32[72,128]{1,0:T(1,128)}', space=vmem, size = 0x9000, scoped, tag = 'internal scratch']
  #allocation2 [shape = 'f32[8,80]{1,0:T(8,128)}', space=vmem, size = 0x1000, scoped, tag = 'scratch operand']
  #allocation3 [shape = 'f32[8,80]{1,0:T(8,128)}', space=vmem, size = 0x1000, scoped, tag = 'scratch operand']
  #allocation4 [shape = 'f32[1,80]{1,0:T(1,128)}', space=vmem, size = 0x200, scoped, tag = 'scratch operand']
  #allocation5 [shape = 'f32[1,80]{1,0:T(1,128)}', space=vmem, size = 0x200, scoped, tag = 'scratch operand']
  %s0 = inlined_call_operand.vmem [shape: f32[96,32], index: 0, kind: input, shape index: {}]
  %s1 = inlined_call_operand.vmem [shape: f32[80,32], index: 1, kind: input, shape index: {}]
  %s2 = inlined_call_operand.vmem [shape: f32[8,32], index: 2, kind: input, shape index: {}]
  %s3 = inlined_call_operand.vmem [shape: f32[16,32], index: 3, kind: input, shape index: {}]
  %s4 = inlined_call_operand.vmem [shape: f32[16,32], index: 4, kind: input, shape index: {}]
  %s5 = inlined_call_operand.hbm [shape: f32[1,1], index: 5, kind: output, shape index: {0}]
  %s6 = inlined_call_operand.hbm [shape: f32[1,1], index: 6, kind: output, shape index: {1}]
  %s7 = inlined_call_operand.hbm [shape: f32[1,1], index: 7, kind: output, shape index: {2}]
  %8 = xla_tuple %s5, %s6, %s7
  %s9 = sld [smem:[#allocation0]]
  $region85: #{clustering_module_forward.1} parent=0
    _
  %s11 = ssub.s32 1, %s9
  %s12 = scalar_select 0, %s11, %s9
  $region1: #{clustering_module_forward.1} parent=0
    #allocation6 [shape = 'u8[512]{0}', space=vmem, size = 0x400, scoped, tag = 'output window, operand 0, single buffered']
    #allocation7 [shape = 's32[2]{0}', space=sflag, size = 0x8, scoped, tag = 'scoped memory for clustering_module_forward.1']
    #allocation8 [shape = 'u8[512]{0}', space=vmem, size = 0x400, scoped, tag = 'output window, operand 1, single buffered']
    #allocation9 [shape = 's32[1]{0}', space=sflag, size = 0x4, scoped, tag = 'scoped memory for clustering_module_forward.1']
    #allocation10 [shape = 'u8[512]{0}', space=vmem, size = 0x400, scoped, tag = 'output window, operand 2, single buffered']
    %13 = vsyncpa [#allocation7], 0
    %14 = vsyncpa [#allocation9], 0
    loop: start=0, step=1, limit=5
    $region2: #{clustering_module_forward.1} parent=1 // loop_pre_header
      _
    $region3: #{clustering_module_forward.1} parent=1 // loop_header
      %s16 = sphi 0, %s20
      %p17 = scmp.ge.s32.totalorder %s16, 5
      %s30 = sphi 0, %s32
      %s33 = sphi 0, %s30
      %s34 = sphi 0, %s33
      %s50 = sphi 0, %s34
      %s62 = sphi 0, %s64
      %s65 = sphi 0, %s62
      %s66 = sphi 0, %s65
      %s82 = sphi 0, %s66
      %s86 = sphi 0, %s86
      %s88 = sphi 0, %s86
      %s89 = sphi 0, %s88
      %s103 = sphi 0, %s89
      %s107 = sphi 0, %s107
      %s109 = sphi 0, %s107
      %s110 = sphi 0, %s109
      %s124 = sphi 0, %s110
      %s128 = sphi 0, %s128
      %s130 = sphi 0, %s128
      %s131 = sphi 0, %s130
      %s145 = sphi 0, %s131
      %s149 = sphi 0, %s149
      %s151 = sphi 0, %s149
      %s152 = sphi 0, %s151
      %s166 = sphi 0, %s152
      %s170 = sphi 0, %s170
      %s172 = sphi 0, %s170
      %s173 = sphi 0, %s172
      %s187 = sphi 0, %s173
      %s191 = sphi 0, %s191
      %s193 = sphi 0, %s191
      %s194 = sphi 0, %s193
      %s208 = sphi 0, %s194
    $region4: #{clustering_module_forward.1} parent=1 // loop_header_branch
      %19 = sbr.rel (%p17) target = $region8
    $region5: #{clustering_module_forward.1} parent=1 // loop_body
      %s21 = ssub.s32 %s16, 1
      %s22 = ssub.s32 %s16, 2
      %s23 = sadd.s32 %s16, 1
      %p24 = scmp.lt.s32.totalorder %s16, 1
      %s25 = scalar_select %p24, %s16, 1
      %p26 = scmp.lt.s32.totalorder %s23, 1
      %s27 = scalar_select %p26, %s23, 1
      %s28 = ssub.s32 %s25, %s27
      %p29 = scmp.eq.s32.totalorder %s28, 0
      %s31 = sadd.s32 %s30, 1
      %s32 = scalar_select %p29, %s30, %s31
      %p35 = pneg %p29
      %p36 = scmp.eq.s32.totalorder %s16, 2
      %p37 = por %p35, %p36
      %p38 = scmp.ne.s32.totalorder %s30, %s33
      %p39 = scmp.eq.s32.totalorder %s16, 0
      %p40 = por %p38, %p39
      %p41 = scmp.ne.s32.totalorder %s30, %s33
      %p42 = scmp.eq.s32.totalorder %s21, 2
      %p43 = por %p41, %p42
      %p44 = scmp.ne.s32.totalorder %s33, %s34
      %p45 = scmp.eq.s32.totalorder %s21, 0
      %p46 = por %p44, %p45
      %p47 = scmp.ne.s32.totalorder %s33, %s34
      %p48 = scmp.eq.s32.totalorder %s22, 2
      %p49 = por %p47, %p48
      %p51 = scmp.ne.s32.totalorder %s34, %s50
      %p52 = scmp.eq.s32.totalorder %s22, 0
      %p53 = por %p51, %p52
      %s54 = ssub.s32 %s16, 2
      %p55 = scmp.gt.s32.totalorder %s54, 0
      %s56 = scalar_select %p55, %s54, 0
      %s57 = ssub.s32 %s23, 2
      %p58 = scmp.gt.s32.totalorder %s57, 0
      %s59 = scalar_select %p58, %s57, 0
      %s60 = ssub.s32 %s56, %s59
      %p61 = scmp.eq.s32.totalorder %s60, 0
      %s63 = sadd.s32 %s62, 1
      %s64 = scalar_select %p61, %s62, %s63
      %p67 = pneg %p61
      %p68 = scmp.eq.s32.totalorder %s16, 2
      %p69 = por %p67, %p68
      %p70 = scmp.ne.s32.totalorder %s62, %s65
      %p71 = scmp.eq.s32.totalorder %s16, 0
      %p72 = por %p70, %p71
      %p73 = scmp.ne.s32.totalorder %s62, %s65
      %p74 = scmp.eq.s32.totalorder %s21, 2
      %p75 = por %p73, %p74
      %p76 = scmp.ne.s32.totalorder %s65, %s66
      %p77 = scmp.eq.s32.totalorder %s21, 0
      %p78 = por %p76, %p77
      %p79 = scmp.ne.s32.totalorder %s65, %s66
      %p80 = scmp.eq.s32.totalorder %s22, 2
      %p81 = por %p79, %p80
      %p83 = scmp.ne.s32.totalorder %s66, %s82
      %p84 = scmp.eq.s32.totalorder %s22, 0
      %p85 = por %p83, %p84
      %s87 = sadd.s32 %s86, 1
      %p90 = scmp.eq.s32.totalorder %s16, 2
      %p91 = scmp.ne.s32.totalorder %s86, %s88
      %p92 = scmp.eq.s32.totalorder %s16, 0
      %p93 = por %p91, %p92
      %p94 = scmp.ne.s32.totalorder %s86, %s88
      %p95 = scmp.eq.s32.totalorder %s21, 2
      %p96 = por %p94, %p95
      %p97 = scmp.ne.s32.totalorder %s88, %s89
      %p98 = scmp.eq.s32.totalorder %s21, 0
      %p99 = por %p97, %p98
      %p100 = scmp.ne.s32.totalorder %s88, %s89
      %p101 = scmp.eq.s32.totalorder %s22, 2
      %p102 = por %p100, %p101
      %p104 = scmp.ne.s32.totalorder %s89, %s103
      %p105 = scmp.eq.s32.totalorder %s22, 0
      %p106 = por %p104, %p105
      %s108 = sadd.s32 %s107, 1
      %p111 = scmp.eq.s32.totalorder %s16, 2
      %p112 = scmp.ne.s32.totalorder %s107, %s109
      %p113 = scmp.eq.s32.totalorder %s16, 0
      %p114 = por %p112, %p113
      %p115 = scmp.ne.s32.totalorder %s107, %s109
      %p116 = scmp.eq.s32.totalorder %s21, 2
      %p117 = por %p115, %p116
      %p118 = scmp.ne.s32.totalorder %s109, %s110
      %p119 = scmp.eq.s32.totalorder %s21, 0
      %p120 = por %p118, %p119
      %p121 = scmp.ne.s32.totalorder %s109, %s110
      %p122 = scmp.eq.s32.totalorder %s22, 2
      %p123 = por %p121, %p122
      %p125 = scmp.ne.s32.totalorder %s110, %s124
      %p126 = scmp.eq.s32.totalorder %s22, 0
      %p127 = por %p125, %p126
      %s129 = sadd.s32 %s128, 1
      %p132 = scmp.eq.s32.totalorder %s16, 2
      %p133 = scmp.ne.s32.totalorder %s128, %s130
      %p134 = scmp.eq.s32.totalorder %s16, 0
      %p135 = por %p133, %p134
      %p136 = scmp.ne.s32.totalorder %s128, %s130
      %p137 = scmp.eq.s32.totalorder %s21, 2
      %p138 = por %p136, %p137
      %p139 = scmp.ne.s32.totalorder %s130, %s131
      %p140 = scmp.eq.s32.totalorder %s21, 0
      %p141 = por %p139, %p140
      %p142 = scmp.ne.s32.totalorder %s130, %s131
      %p143 = scmp.eq.s32.totalorder %s22, 2
      %p144 = por %p142, %p143
      %p146 = scmp.ne.s32.totalorder %s131, %s145
      %p147 = scmp.eq.s32.totalorder %s22, 0
      %p148 = por %p146, %p147
      %s150 = sadd.s32 %s149, 1
      %p153 = scmp.eq.s32.totalorder %s16, 2
      %p154 = scmp.ne.s32.totalorder %s149, %s151
      %p155 = scmp.eq.s32.totalorder %s16, 0
      %p156 = por %p154, %p155
      %p157 = scmp.ne.s32.totalorder %s149, %s151
      %p158 = scmp.eq.s32.totalorder %s21, 2
      %p159 = por %p157, %p158
      %p160 = scmp.ne.s32.totalorder %s151, %s152
      %p161 = scmp.eq.s32.totalorder %s21, 0
      %p162 = por %p160, %p161
      %p163 = scmp.ne.s32.totalorder %s151, %s152
      %p164 = scmp.eq.s32.totalorder %s22, 2
      %p165 = por %p163, %p164
      %p167 = scmp.ne.s32.totalorder %s152, %s166
      %p168 = scmp.eq.s32.totalorder %s22, 0
      %p169 = por %p167, %p168
      %s171 = sadd.s32 %s170, 1
      %p174 = scmp.eq.s32.totalorder %s16, 2
      %p175 = scmp.ne.s32.totalorder %s170, %s172
      %p176 = scmp.eq.s32.totalorder %s16, 0
      %p177 = por %p175, %p176
      %p178 = scmp.ne.s32.totalorder %s170, %s172
      %p179 = scmp.eq.s32.totalorder %s21, 2
      %p180 = por %p178, %p179
      %p181 = scmp.ne.s32.totalorder %s172, %s173
      %p182 = scmp.eq.s32.totalorder %s21, 0
      %p183 = por %p181, %p182
      %p184 = scmp.ne.s32.totalorder %s172, %s173
      %p185 = scmp.eq.s32.totalorder %s22, 2
      %p186 = por %p184, %p185
      %p188 = scmp.ne.s32.totalorder %s173, %s187
      %p189 = scmp.eq.s32.totalorder %s22, 0
      %p190 = por %p188, %p189
      %s192 = sadd.s32 %s191, 1
      %p195 = scmp.eq.s32.totalorder %s16, 2
      %p196 = scmp.ne.s32.totalorder %s191, %s193
      %p197 = scmp.eq.s32.totalorder %s16, 0
      %p198 = por %p196, %p197
      %p199 = scmp.ne.s32.totalorder %s191, %s193
      %p200 = scmp.eq.s32.totalorder %s21, 2
      %p201 = por %p199, %p200
      %p202 = scmp.ne.s32.totalorder %s193, %s194
      %p203 = scmp.eq.s32.totalorder %s21, 0
      %p204 = por %p202, %p203
      %p205 = scmp.ne.s32.totalorder %s193, %s194
      %p206 = scmp.eq.s32.totalorder %s22, 2
      %p207 = por %p205, %p206
      %p209 = scmp.ne.s32.totalorder %s194, %s208
      %p210 = scmp.eq.s32.totalorder %s22, 0
      %p211 = por %p209, %p210
      %p212 = scmp.le.s32.totalorder 1, %s16
      %p213 = scmp.lt.s32.totalorder %s16, 4
      %p214 = pnand %p212, %p213
      %p215 = pneg %p214
      // Predicated region
      $region9: #{clustering_module_forward.1} parent=5 // pred_check
        _
      $region10: #{clustering_module_forward.1} parent=5 // pred_check_branch
        %217 = sbr.rel (%p214) target = $region12
      $region11: #{clustering_module_forward.1} parent=5 // pred_region
        %s218 = ssub.s32 %s16, 1
        // Predicated region
        $region13: #{clustering_module_forward.1} parent=11 // pred_check
          %p219 = pneg %p99
        $region14: #{clustering_module_forward.1} parent=11 // pred_check_branch
          %221 = sbr.rel (%p219) target = $region16
        $region15: #{clustering_module_forward.1} parent=11 // pred_region
          _
        $region16: #{clustering_module_forward.1} parent=11 // pred_fallthru
          _
        // Predicated region
        $region17: #{clustering_module_forward.1} parent=11 // pred_check
          %p222 = pneg %p120
        $region18: #{clustering_module_forward.1} parent=11 // pred_check_branch
          %224 = sbr.rel (%p222) target = $region20
        $region19: #{clustering_module_forward.1} parent=11 // pred_region
          _
        $region20: #{clustering_module_forward.1} parent=11 // pred_fallthru
          _
        // Predicated region
        $region21: #{clustering_module_forward.1} parent=11 // pred_check
          %p225 = pneg %p141
        $region22: #{clustering_module_forward.1} parent=11 // pred_check_branch
          %227 = sbr.rel (%p225) target = $region24
        $region23: #{clustering_module_forward.1} parent=11 // pred_region
          _
        $region24: #{clustering_module_forward.1} parent=11 // pred_fallthru
          _
      $region12: #{clustering_module_forward.1} parent=5 // pred_fallthru
        _
      %p228 = scmp.lt.s32.totalorder %s16, 3
      // Predicated region
      $region25: #{clustering_module_forward.1} parent=5 // pred_check
        %p229 = pneg %p228
      $region26: #{clustering_module_forward.1} parent=5 // pred_check_branch
        %231 = sbr.rel (%p229) target = $region28
      $region27: #{clustering_module_forward.1} parent=5 // pred_region
        // Predicated region
        $region29: #{clustering_module_forward.1} parent=27 // pred_check
          %p232 = pneg %p40
        $region30: #{clustering_module_forward.1} parent=27 // pred_check_branch
          %234 = sbr.rel (%p232) target = $region32
        $region31: #{clustering_module_forward.1} parent=27 // pred_region
          %p235 = scmp.lt.s32.totalorder %s16, 1
          %s236 = scalar_select %p235, %s16, 1
          %s237 = smul.u32 10, %s236
          %s238 = ssub.s32 12, %s237
          %p239 = scmp.lt.s32.totalorder %s238, 10
          %s240 = scalar_select %p239, %s238, 10
          %s241 = smul.u32 8, %s240
          %p242 = scmp.lt.s32.totalorder %s237, 11
          %s243 = scalar_select %p242, %s237, 11
          %s244 = smul.addr %s243, 8
          %s245 = scalar_lea.vmem %s0, %s244
          %p246 = scmp.lt.s32.totalorder %s16, 1
          %s247 = scalar_select %p246, %s16, 1
          %s248 = smul.u32 10, %s247
          %s249 = ssub.s32 12, %s248
          %p250 = scmp.lt.s32.totalorder %s249, 10
          %s251 = scalar_select %p250, %s249, 10
          %s252 = smul.u32 8, %s251
        $region32: #{clustering_module_forward.1} parent=27 // pred_fallthru
          _
        // Predicated region
        $region33: #{clustering_module_forward.1} parent=27 // pred_check
          %p253 = pneg %p72
        $region34: #{clustering_module_forward.1} parent=27 // pred_check_branch
          %255 = sbr.rel (%p253) target = $region36
        $region35: #{clustering_module_forward.1} parent=27 // pred_region
          %s256 = ssub.s32 %s16, 2
          %p257 = scmp.gt.s32.totalorder %s256, 0
          %s258 = scalar_select %p257, %s256, 0
          %s259 = smul.u32 10, %s258
          %p260 = scmp.lt.s32.totalorder %s259, 9
          %s261 = scalar_select %p260, %s259, 9
          %s262 = smul.addr %s261, 8
          %s263 = scalar_lea.vmem %s1, %s262
          %s264 = ssub.s32 %s16, 2
          %p265 = scmp.gt.s32.totalorder %s264, 0
          %s266 = scalar_select %p265, %s264, 0
          %s267 = smul.u32 10, %s266
        $region36: #{clustering_module_forward.1} parent=27 // pred_fallthru
          _
      $region28: #{clustering_module_forward.1} parent=5 // pred_fallthru
        _
      %p268 = scmp.le.s32.totalorder 1, %s16
      %p269 = scmp.lt.s32.totalorder %s16, 4
      %p270 = pnand %p268, %p269
      %p271 = pneg %p270
      // Predicated region
      $region37: #{clustering_module_forward.1} parent=5 // pred_check
        _
      $region38: #{clustering_module_forward.1} parent=5 // pred_check_branch
        %273 = sbr.rel (%p270) target = $region40
      $region39: #{clustering_module_forward.1} parent=5 // pred_region
        %s274 = ssub.s32 %s16, 1
        %p275 = scmp.lt.s32.totalorder %s21, 1
        %s276 = scalar_select %p275, %s21, 1
        %s277 = smul.u32 10, %s276
        %s278 = ssub.s32 12, %s277
        %p279 = scmp.lt.s32.totalorder %s278, 10
        %s280 = scalar_select %p279, %s278, 10
        %s281 = smul.u32 8, %s280
        %p282 = scmp.lt.s32.totalorder %s277, 11
        %s283 = scalar_select %p282, %s277, 11
        %s284 = smul.addr %s283, 8
        %s285 = scalar_lea.vmem %s0, %s284
        %p286 = pneg %p46
        %p287 = pneg %p43
        %s288 = ssub.s32 %s21, 2
        %p289 = scmp.gt.s32.totalorder %s288, 0
        %s290 = scalar_select %p289, %s288, 0
        %s291 = smul.u32 10, %s290
        %p292 = scmp.lt.s32.totalorder %s291, 9
        %s293 = scalar_select %p292, %s291, 9
        %s294 = smul.addr %s293, 8
        %s295 = scalar_lea.vmem %s1, %s294
        %p296 = pneg %p78
        %p297 = pneg %p75
        %p298 = pneg %p99
        %p299 = pneg %p96
        %p300 = pneg %p120
        %p301 = pneg %p117
        %p302 = pneg %p141
        %p303 = pneg %p138
        %p304 = pneg %p162
        %p305 = pneg %p159
        %p306 = pneg %p183
        %p307 = pneg %p180
        %p308 = pneg %p204
        %p309 = pneg %p201
        %p310 = scmp.lt.s32.totalorder %s21, 1
        %s311 = scalar_select %p310, %s21, 1
        %s312 = smul.u32 10, %s311
        %s313 = ssub.s32 12, %s312
        %p314 = scmp.lt.s32.totalorder %s313, 10
        %s315 = scalar_select %p314, %s313, 10
        %s316 = smul.u32 8, %s315
        %p317 = scmp.lt.s32.totalorder %s312, 11
        %s318 = scalar_select %p317, %s312, 11
        %s319 = smul.addr %s318, 8
        %s320 = scalar_lea.vmem %s0, %s319
        %p321 = scmp.lt.s32.totalorder %s21, 1
        %s322 = scalar_select %p321, %s21, 1
        %s323 = smul.u32 10, %s322
        %s324 = ssub.s32 12, %s323
        %p325 = scmp.lt.s32.totalorder %s324, 10
        %s326 = scalar_select %p325, %s324, 10
        %s327 = smul.u32 8, %s326
        %s328 = ssub.s32 %s21, 2
        %p329 = scmp.gt.s32.totalorder %s328, 0
        %s330 = scalar_select %p329, %s328, 0
        %s331 = smul.u32 10, %s330
        %p332 = scmp.lt.s32.totalorder %s331, 9
        %s333 = scalar_select %p332, %s331, 9
        %s334 = smul.addr %s333, 8
        %s335 = scalar_lea.vmem %s1, %s334
        %s336 = ssub.s32 %s21, 2
        %p337 = scmp.gt.s32.totalorder %s336, 0
        %s338 = scalar_select %p337, %s336, 0
        %s339 = smul.u32 10, %s338
        %p340 = scmp.eq.s32.totalorder %s21, 0
        // Predicated region
        $region41: #{clustering_module_forward.1} parent=39 // pred_check
          %p341 = pneg %p340
        $region42: #{clustering_module_forward.1} parent=39 // pred_check_branch
          %343 = sbr.rel (%p341) target = $region44
        $region43: #{clustering_module_forward.1} parent=39 // pred_region
          %vm344 = vcmask 654336
          %345 = vst.msk [vmem:[#allocation2] sm:$0xff] %vm344, 0.0
          %346 = vst.msk [vmem:[#allocation3] sm:$0xff] %vm344, 0.0
          %vm347 = vcmask 647168
          %348 = vst.msk [vmem:[#allocation4] sm:$0x1] %vm347, 0.0
          %349 = vst.msk [vmem:[#allocation5] sm:$0x1] %vm347, 0.0
        $region44: #{clustering_module_forward.1} parent=39 // pred_fallthru
          _
        %v350 = vld [vmem:[%s2] sm:$0xff]
        %v351 = vmul.f32 %v350, %v350
        %vm352 = vcmask 261120
        %v353 = vsel %vm352, %v351, 0.0
        %354 = vadd.xlane.f32.xlu0 %v353
        %v355 = vpop.xlane.xlu0 %354
        %p356 = scmp.lt.s32.totalorder %s21, 2
        // Predicated region
        $region45: #{clustering_module_forward.1} parent=39 // pred_check
          %p357 = pneg %p356
        $region46: #{clustering_module_forward.1} parent=39 // pred_check_branch
          %359 = sbr.rel (%p357) target = $region48
        $region47: #{clustering_module_forward.1} parent=39 // pred_region
          %v360 = vld [vmem:[%s320] sm:$0xff]
          %v361 = vld [vmem:[%s320 + $0x8] sm:$0xff]
          %v362 = vld [vmem:[%s320 + $0x10] sm:$0xff]
          %v363 = vld [vmem:[%s320 + $0x18] sm:$0xff]
          %v364 = vld [vmem:[%s320 + $0x20] sm:$0xff]
          %v365 = vld [vmem:[%s320 + $0x28] sm:$0xff]
          %v366 = vld [vmem:[%s320 + $0x30] sm:$0xff]
          %v367 = vld [vmem:[%s320 + $0x38] sm:$0xff]
          %v368 = vld [vmem:[%s320 + $0x40] sm:$0xff]
          %v369 = vld [vmem:[%s320 + $0x48] sm:$0xff]
          %v370 = vmul.f32 %v360, %v360
          %v371 = vmul.f32 %v361, %v361
          %v372 = vmul.f32 %v362, %v362
          %v373 = vmul.f32 %v363, %v363
          %v374 = vmul.f32 %v364, %v364
          %v375 = vmul.f32 %v365, %v365
          %v376 = vmul.f32 %v366, %v366
          %v377 = vmul.f32 %v367, %v367
          %v378 = vmul.f32 %v368, %v368
          %v379 = vmul.f32 %v369, %v369
          %v381 = vsel %vm352, 1.0, 0
          %v384 = vsel %vm352, %v370, 0
          %v387 = vsel %vm352, %v371, 0
          %v390 = vsel %vm352, %v372, 0
          %v393 = vsel %vm352, %v373, 0
          %v396 = vsel %vm352, %v374, 0
          %v399 = vsel %vm352, %v375, 0
          %v402 = vsel %vm352, %v376, 0
          %v405 = vsel %vm352, %v377, 0
          %v408 = vsel %vm352, %v378, 0
          %v411 = vsel %vm352, %v379, 0
          %413 = vmatpush.xpose.msra.mxu0 0.0
          %414 = vmatpush.xpose.msra.mxu0 0.0
          %415 = vmatpush.xpose.msra.mxu0 0.0
          %416 = vmatpush.xpose.msra.mxu0 0.0
          %417 = vmatpush.xpose.msra.mxu0 0.0
          %418 = vmatpush.xpose.msra.mxu0 0.0
          %419 = vmatpush.xpose.msra.mxu0 %v411
          %420 = vmatpush.xpose.msra.mxu0 %v408
          %421 = vmatpush.xpose.msra.mxu0 %v405
          %422 = vmatpush.xpose.msra.mxu0 %v402
          %423 = vmatpush.xpose.msra.mxu0 %v399
          %424 = vmatpush.xpose.msra.mxu0 %v396
          %425 = vmatpush.xpose.msra.mxu0 %v393
          %426 = vmatpush.xpose.msra.mxu0 %v390
          %427 = vmatpush.xpose.msra.mxu0 %v387
          %428 = vmatpush.xpose.msra.mxu0 %v384
          %429 = vmatmul.f32.gmra.mxu0 %v381
          %v430 = vpop.f32.mrf.mxu0
          %v431 = vadd.f32 0.0, %v430
          %432 = vdwg.mxu0
          %v434 = vsel %vm352, %v350, 0
          %v437 = vsel %vm352, %v360, 0
          %v440 = vsel %vm352, %v361, 0
          %v443 = vsel %vm352, %v362, 0
          %v446 = vsel %vm352, %v363, 0
          %v449 = vsel %vm352, %v364, 0
          %v452 = vsel %vm352, %v365, 0
          %v455 = vsel %vm352, %v366, 0
          %v458 = vsel %vm352, %v367, 0
          %v461 = vsel %vm352, %v368, 0
          %v464 = vsel %vm352, %v369, 0
          %466 = vmatpush.xpose.msra.mxu0 0.0
          %467 = vmatpush.xpose.msra.mxu0 0.0
          %468 = vmatpush.xpose.msra.mxu0 0.0
          %469 = vmatpush.xpose.msra.mxu0 0.0
          %470 = vmatpush.xpose.msra.mxu0 0.0
          %471 = vmatpush.xpose.msra.mxu0 0.0
          %472 = vmatpush.xpose.msra.mxu0 %v464
          %473 = vmatpush.xpose.msra.mxu0 %v461
          %474 = vmatpush.xpose.msra.mxu0 %v458
          %475 = vmatpush.xpose.msra.mxu0 %v455
          %476 = vmatpush.xpose.msra.mxu0 %v452
          %477 = vmatpush.xpose.msra.mxu0 %v449
          %478 = vmatpush.xpose.msra.mxu0 %v446
          %479 = vmatpush.xpose.msra.mxu0 %v443
          %480 = vmatpush.xpose.msra.mxu0 %v440
          %481 = vmatpush.xpose.msra.mxu0 %v437
          %482 = vmatmul.f32.gmra.mxu0 %v434
          %v483 = vpop.f32.mrf.mxu0
          %v484 = vadd.f32 0.0, %v483
          %485 = vdwg.mxu0
          %v486 = vperm.slane %v431, 0
          %v487 = vadd.f32 %v355, %v486
          %v488 = vmul.f32 %v484, 2.0
          %v489 = vsub.f32 %v487, %v488
          %v490 = vmax.f32 %v489, 0.0
          %v491 = vrsqrt.pop %v490
          %v492 = vmul.f32 %v491, %v490
          %v493 = vmul.f32 %v492, %v491
          %v494 = vmul.f32 0.5, %v493
          %v495 = vsub.f32 1.5, %v494
          %v496 = vmul.f32 %v491, %v495
          %v497 = vmul.f32 %v490, %v496
          %vm498 = vcmp.eq.f32.partialorder %v490, inf
          %v499 = vsel %vm498, %v490, %v497
          %vm500 = vcmp.eq.f32.partialorder %v490, 0.0
          %v501 = vand.u32 %v490, 2147483648
          %v502 = vsel %vm500, %v501, %v499
          %v503 = vlaneseq
          %v504 = vand.u32 %v503, 127
          %s505 = smul.u32 %s21, 80
          %v506 = vstv %s505
          %v507 = vadd.s32 %v506, %v504
          %vm508 = vcmp.lt.s32.totalorder %v507, 96
          %v509 = vld [vmem:[#allocation2] sm:$0xff]
          %v510 = vsel %vm508, 1, 0
          %vm511 = vcmp.eq.s32.totalorder %v510, 1
          %v512 = vsel %vm511, %v502, 0.0
          %v513 = vadd.f32 %v509, %v512
          %vm514 = vcmask 654336
          %515 = vst.msk [vmem:[#allocation2] sm:$0xff] %vm514, %v513
          %v516 = vsel %vm514, %v490, inf
          %v517 = vrot.slane %v516, 4
          %v518 = vmin.f32 %v516, %v517
          %v519 = vrot.slane %v518, 2
          %v520 = vmin.f32 %v518, %v519
          %v521 = vrot.slane %v520, 1
          %v522 = vmin.f32 %v520, %v521
          %v523 = vld [vmem:[#allocation4] sm:$0x1]
          %v524 = vsel %vm508, %v522, 0.0
          %v525 = vadd.f32 %v523, %v524
          %vm526 = vcmask 647168
          %527 = vst.msk [vmem:[#allocation4] sm:$0x1] %vm526, %v525
        $region48: #{clustering_module_forward.1} parent=39 // pred_fallthru
          _
        %p528 = scmp.ge.s32.totalorder %s21, 2
        // Predicated region
        $region49: #{clustering_module_forward.1} parent=39 // pred_check
          %p529 = pneg %p528
        $region50: #{clustering_module_forward.1} parent=39 // pred_check_branch
          %531 = sbr.rel (%p529) target = $region52
        $region51: #{clustering_module_forward.1} parent=39 // pred_region
          %s532 = ssub.s32 %s21, 2
          %v533 = vld [vmem:[%s335] sm:$0xff]
          %v534 = vld [vmem:[%s335 + $0x8] sm:$0xff]
          %v535 = vld [vmem:[%s335 + $0x10] sm:$0xff]
          %v536 = vld [vmem:[%s335 + $0x18] sm:$0xff]
          %v537 = vld [vmem:[%s335 + $0x20] sm:$0xff]
          %v538 = vld [vmem:[%s335 + $0x28] sm:$0xff]
          %v539 = vld [vmem:[%s335 + $0x30] sm:$0xff]
          %v540 = vld [vmem:[%s335 + $0x38] sm:$0xff]
          %v541 = vld [vmem:[%s335 + $0x40] sm:$0xff]
          %v542 = vld [vmem:[%s335 + $0x48] sm:$0xff]
          %v543 = vmul.f32 %v533, %v533
          %v544 = vmul.f32 %v534, %v534
          %v545 = vmul.f32 %v535, %v535
          %v546 = vmul.f32 %v536, %v536
          %v547 = vmul.f32 %v537, %v537
          %v548 = vmul.f32 %v538, %v538
          %v549 = vmul.f32 %v539, %v539
          %v550 = vmul.f32 %v540, %v540
          %v551 = vmul.f32 %v541, %v541
          %v552 = vmul.f32 %v542, %v542
          %v554 = vsel %vm352, 1.0, 0
          %v557 = vsel %vm352, %v543, 0
          %v560 = vsel %vm352, %v544, 0
          %v563 = vsel %vm352, %v545, 0
          %v566 = vsel %vm352, %v546, 0
          %v569 = vsel %vm352, %v547, 0
          %v572 = vsel %vm352, %v548, 0
          %v575 = vsel %vm352, %v549, 0
          %v578 = vsel %vm352, %v550, 0
          %v581 = vsel %vm352, %v551, 0
          %v584 = vsel %vm352, %v552, 0
          %586 = vmatpush.xpose.msra.mxu0 0.0
          %587 = vmatpush.xpose.msra.mxu0 0.0
          %588 = vmatpush.xpose.msra.mxu0 0.0
          %589 = vmatpush.xpose.msra.mxu0 0.0
          %590 = vmatpush.xpose.msra.mxu0 0.0
          %591 = vmatpush.xpose.msra.mxu0 0.0
          %592 = vmatpush.xpose.msra.mxu0 %v584
          %593 = vmatpush.xpose.msra.mxu0 %v581
          %594 = vmatpush.xpose.msra.mxu0 %v578
          %595 = vmatpush.xpose.msra.mxu0 %v575
          %596 = vmatpush.xpose.msra.mxu0 %v572
          %597 = vmatpush.xpose.msra.mxu0 %v569
          %598 = vmatpush.xpose.msra.mxu0 %v566
          %599 = vmatpush.xpose.msra.mxu0 %v563
          %600 = vmatpush.xpose.msra.mxu0 %v560
          %601 = vmatpush.xpose.msra.mxu0 %v557
          %602 = vmatmul.f32.gmra.mxu0 %v554
          %v603 = vpop.f32.mrf.mxu0
          %v604 = vadd.f32 0.0, %v603
          %605 = vdwg.mxu0
          %v607 = vsel %vm352, %v350, 0
          %v610 = vsel %vm352, %v533, 0
          %v613 = vsel %vm352, %v534, 0
          %v616 = vsel %vm352, %v535, 0
          %v619 = vsel %vm352, %v536, 0
          %v622 = vsel %vm352, %v537, 0
          %v625 = vsel %vm352, %v538, 0
          %v628 = vsel %vm352, %v539, 0
          %v631 = vsel %vm352, %v540, 0
          %v634 = vsel %vm352, %v541, 0
          %v637 = vsel %vm352, %v542, 0
          %639 = vmatpush.xpose.msra.mxu0 0.0
          %640 = vmatpush.xpose.msra.mxu0 0.0
          %641 = vmatpush.xpose.msra.mxu0 0.0
          %642 = vmatpush.xpose.msra.mxu0 0.0
          %643 = vmatpush.xpose.msra.mxu0 0.0
          %644 = vmatpush.xpose.msra.mxu0 0.0
          %645 = vmatpush.xpose.msra.mxu0 %v637
          %646 = vmatpush.xpose.msra.mxu0 %v634
          %647 = vmatpush.xpose.msra.mxu0 %v631
          %648 = vmatpush.xpose.msra.mxu0 %v628
          %649 = vmatpush.xpose.msra.mxu0 %v625
          %650 = vmatpush.xpose.msra.mxu0 %v622
          %651 = vmatpush.xpose.msra.mxu0 %v619
          %652 = vmatpush.xpose.msra.mxu0 %v616
          %653 = vmatpush.xpose.msra.mxu0 %v613
          %654 = vmatpush.xpose.msra.mxu0 %v610
          %655 = vmatmul.f32.gmra.mxu0 %v607
          %v656 = vpop.f32.mrf.mxu0
          %v657 = vadd.f32 0.0, %v656
          %658 = vdwg.mxu0
          %v659 = vperm.slane %v604, 0
          %v660 = vadd.f32 %v355, %v659
          %v661 = vmul.f32 %v657, 2.0
          %v662 = vsub.f32 %v660, %v661
          %v663 = vmax.f32 %v662, 0.0
          %v664 = vrsqrt.pop %v663
          %v665 = vmul.f32 %v664, %v663
          %v666 = vmul.f32 %v665, %v664
          %v667 = vmul.f32 0.5, %v666
          %v668 = vsub.f32 1.5, %v667
          %v669 = vmul.f32 %v664, %v668
          %v670 = vmul.f32 %v663, %v669
          %vm671 = vcmp.eq.f32.partialorder %v663, inf
          %v672 = vsel %vm671, %v663, %v670
          %vm673 = vcmp.eq.f32.partialorder %v663, 0.0
          %v674 = vand.u32 %v663, 2147483648
          %v675 = vsel %vm673, %v674, %v672
          %v676 = vlaneseq
          %v677 = vand.u32 %v676, 127
          %s678 = smul.u32 %s532, 80
          %v679 = vstv %s678
          %v680 = vadd.s32 %v679, %v677
          %vm681 = vcmp.lt.s32.totalorder %v680, 80
          %v682 = vld [vmem:[#allocation3] sm:$0xff]
          %v683 = vsel %vm681, 1, 0
          %vm684 = vcmp.eq.s32.totalorder %v683, 1
          %v685 = vsel %vm684, %v675, 0.0
          %v686 = vadd.f32 %v682, %v685
          %vm687 = vcmask 654336
          %688 = vst.msk [vmem:[#allocation3] sm:$0xff] %vm687, %v686
          %v689 = vsel %vm687, %v663, inf
          %v690 = vrot.slane %v689, 4
          %v691 = vmin.f32 %v689, %v690
          %v692 = vrot.slane %v691, 2
          %v693 = vmin.f32 %v691, %v692
          %v694 = vrot.slane %v693, 1
          %v695 = vmin.f32 %v693, %v694
          %v696 = vld [vmem:[#allocation5] sm:$0x1]
          %v697 = vsel %vm681, %v695, 0.0
          %v698 = vadd.f32 %v696, %v697
          %vm699 = vcmask 647168
          %700 = vst.msk [vmem:[#allocation5] sm:$0x1] %vm699, %v698
        $region52: #{clustering_module_forward.1} parent=39 // pred_fallthru
          _
        %p701 = scmp.eq.s32.totalorder %s21, 2
        // Predicated region
        $region53: #{clustering_module_forward.1} parent=39 // pred_check
          %p702 = pneg %p701
        $region54: #{clustering_module_forward.1} parent=39 // pred_check_branch
          %704 = sbr.rel (%p702) target = $region56
        $region55: #{clustering_module_forward.1} parent=39 // pred_region
          %v705 = vld [vmem:[#allocation2] sm:$0xff]
          %vm706 = vcmask 654336
          %v707 = vsel %vm706, %v705, 0.0
          %708 = vadd.xlane.f32.xlu0 %v707
          %v709 = vpop.xlane.xlu0 %708
          %v710 = vld [vmem:[#allocation3] sm:$0xff]
          %v711 = vsel %vm706, %v710, 0.0
          %712 = vadd.xlane.f32.xlu0 %v711
          %v713 = vpop.xlane.xlu0 %712
          %v714 = vrot.slane %v709, 4
          %v715 = vmin.f32 %v709, %v714
          %v716 = vrot.slane %v715, 2
          %v717 = vmin.f32 %v715, %v716
          %v718 = vrot.slane %v717, 1
          %v719 = vmin.f32 %v717, %v718
          %s720 = vtos %v719
          %v721 = vstv %s720
          %v722 = vrot.slane %v709, 4
          %v723 = vmax.f32 %v709, %v722
          %v724 = vrot.slane %v723, 2
          %v725 = vmax.f32 %v723, %v724
          %v726 = vrot.slane %v725, 1
          %v727 = vmax.f32 %v725, %v726
          %s728 = vtos %v727
          %v729 = vstv %s728
          %v730 = vsub.f32 %v709, %v721
          %v731 = vsub.f32 %v729, %v721
          %v732 = vadd.f32 %v731, 1e-05
          %v733 = vrcp.pop %v732
          %v734 = vmul.f32 %v732, %v733
          %v735 = vsub.f32 1.0, %v734
          %v736 = vmul.f32 %v733, %v735
          %v737 = vadd.f32 %v733, %v736
          %vm738 = vweird.f32 %v732
          %vm739 = vweird.f32 %v733
          %vm740 = vmor %vm738, %vm739
          %v741 = vsel %vm740, %v733, %v737
          %v742 = vand.u32 2147483647, %v732
          %vm743 = vcmp.eq.f32.partialorder %v742, 8.507059e+37
          %v744 = vand.u32 %v732, 2147483648
          %v745 = vor.u32 1.1754944e-38, %v744
          %v746 = vsel %vm743, %v745, %v741
          %v747 = vmul.f32 %v730, %v746
          %v748 = vrot.slane %v713, 4
          %v749 = vmin.f32 %v713, %v748
          %v750 = vrot.slane %v749, 2
          %v751 = vmin.f32 %v749, %v750
          %v752 = vrot.slane %v751, 1
          %v753 = vmin.f32 %v751, %v752
          %s754 = vtos %v753
          %v755 = vstv %s754
          %v756 = vrot.slane %v713, 4
          %v757 = vmax.f32 %v713, %v756
          %v758 = vrot.slane %v757, 2
          %v759 = vmax.f32 %v757, %v758
          %v760 = vrot.slane %v759, 1
          %v761 = vmax.f32 %v759, %v760
          %s762 = vtos %v761
          %v763 = vstv %s762
          %v764 = vsub.f32 %v713, %v755
          %v765 = vsub.f32 %v763, %v755
          %v766 = vadd.f32 %v765, 1e-05
          %v767 = vrcp.pop %v766
          %v768 = vmul.f32 %v766, %v767
          %v769 = vsub.f32 1.0, %v768
          %v770 = vmul.f32 %v767, %v769
          %v771 = vadd.f32 %v767, %v770
          %vm772 = vweird.f32 %v766
          %vm773 = vweird.f32 %v767
          %vm774 = vmor %vm772, %vm773
          %v775 = vsel %vm774, %v767, %v771
          %v776 = vand.u32 2147483647, %v766
          %vm777 = vcmp.eq.f32.partialorder %v776, 8.507059e+37
          %v778 = vand.u32 %v766, 2147483648
          %v779 = vor.u32 1.1754944e-38, %v778
          %v780 = vsel %vm777, %v779, %v775
          %v781 = vmul.f32 %v764, %v780
          %v782 = vsub.f32 %v747, %v781
          %v783 = vmul.f32 %v782, %v782
          %vm784 = vcmask 7168
          %v785 = vsel %vm784, %v783, 0.0
          %786 = vadd.xlane.f32.xlu0 %v785
          %v787 = vpop.xlane.xlu0 %786
          %v788 = vrot.slane %v787, 4
          %v789 = vadd.f32 %v787, %v788
          %v790 = vrot.slane %v789, 2
          %v791 = vadd.f32 %v789, %v790
          %v792 = vrot.slane %v791, 1
          %v793 = vadd.f32 %v791, %v792
          %s794 = vtos %v793
          %v795 = vstv %s794
          %v796 = vrsqrt.pop %v795
          %v797 = vmul.f32 %v796, %v795
          %v798 = vmul.f32 %v797, %v796
          %v799 = vmul.f32 0.5, %v798
          %v800 = vsub.f32 1.5, %v799
          %v801 = vmul.f32 %v796, %v800
          %v802 = vmul.f32 %v795, %v801
          %vm803 = vcmp.eq.f32.partialorder %v795, inf
          %v804 = vsel %vm803, %v795, %v802
          %vm805 = vcmp.eq.f32.partialorder %v795, 0.0
          %v806 = vand.u32 %v795, 2147483648
          %v807 = vsel %vm805, %v806, %v804
          %vm808 = vcmask 0
          %809 = vst.msk [vmem:[#allocation6] sm:$0x1] %vm808, %v807
          %v811 = vsel %vm352, %v350, 0
          %813 = vmatpush.xpose.msra.mxu0 0.0
          %814 = vmatpush.xpose.msra.mxu0 0.0
          %815 = vmatpush.xpose.msra.mxu0 0.0
          %816 = vmatpush.xpose.msra.mxu0 0.0
          %817 = vmatpush.xpose.msra.mxu0 0.0
          %818 = vmatpush.xpose.msra.mxu0 0.0
          %819 = vmatpush.xpose.msra.mxu0 0.0
          %820 = vmatpush.xpose.msra.mxu0 0.0
          %821 = vmatpush.xpose.msra.mxu0 0.0
          %822 = vmatpush.xpose.msra.mxu0 0.0
          %823 = vmatpush.xpose.msra.mxu0 0.0
          %824 = vmatpush.xpose.msra.mxu0 0.0
          %825 = vmatpush.xpose.msra.mxu0 0.0
          %826 = vmatpush.xpose.msra.mxu0 0.0
          %827 = vmatpush.xpose.msra.mxu0 0.0
          %828 = vmatpush.xpose.msra.mxu0 %v811
          %829 = vmatmul.f32.gmra.mxu0 %v811
          %v830 = vpop.f32.mrf.mxu0
          %v831 = vadd.f32 0.0, %v830
          %832 = vdwg.mxu0
          %v834 = vsel %vm352, 1.0, 0
          %v837 = vsel %vm352, %v351, 0
          %839 = vmatpush.xpose.msra.mxu0 0.0
          %840 = vmatpush.xpose.msra.mxu0 0.0
          %841 = vmatpush.xpose.msra.mxu0 0.0
          %842 = vmatpush.xpose.msra.mxu0 0.0
          %843 = vmatpush.xpose.msra.mxu0 0.0
          %844 = vmatpush.xpose.msra.mxu0 0.0
          %845 = vmatpush.xpose.msra.mxu0 0.0
          %846 = vmatpush.xpose.msra.mxu0 0.0
          %847 = vmatpush.xpose.msra.mxu0 0.0
          %848 = vmatpush.xpose.msra.mxu0 0.0
          %849 = vmatpush.xpose.msra.mxu0 0.0
          %850 = vmatpush.xpose.msra.mxu0 0.0
          %851 = vmatpush.xpose.msra.mxu0 0.0
          %852 = vmatpush.xpose.msra.mxu0 0.0
          %853 = vmatpush.xpose.msra.mxu0 0.0
          %854 = vmatpush.xpose.msra.mxu0 %v837
          %855 = vmatmul.f32.gmra.mxu0 %v834
          %v856 = vpop.f32.mrf.mxu0
          %v857 = vadd.f32 0.0, %v856
          %858 = vdwg.mxu0
          %v859 = vperm.slane %v857, 0
          %v860 = vadd.f32 %v355, %v859
          %v861 = vmul.f32 %v831, 2.0
          %v862 = vsub.f32 %v860, %v861
          %v863 = vmax.f32 %v862, 0.0
          %v864 = vlaneseq
          %v865 = vshrl.u32 %v864, 7
          %v866 = vlaneseq
          %v867 = vand.u32 %v866, 127
          %vm868 = vcmp.ne.s32.totalorder %v865, %v867
          %v869 = vsel %vm868, %v863, 0.0
          %vm870 = vcmask 64512
          %v871 = vsel %vm870, %v869, 0.0
          %872 = vadd.xlane.f32.xlu0 %v871
          %v873 = vpop.xlane.xlu0 %872
          %v874 = vrot.slane %v873, 4
          %v875 = vadd.f32 %v873, %v874
          %v876 = vrot.slane %v875, 2
          %v877 = vadd.f32 %v875, %v876
          %v878 = vrot.slane %v877, 1
          %v879 = vadd.f32 %v877, %v878
          %s880 = vtos %v879
          %v881 = vstv %s880
          %v882 = vrcp.pop 56.0
          %v883 = vmul.f32 56.0, %v882
          %v884 = vsub.f32 1.0, %v883
          %v885 = vmul.f32 %v882, %v884
          %v886 = vadd.f32 %v882, %v885
          %vm887 = vweird.f32 %v882
          %v888 = vsel %vm887, %v882, %v886
          %v889 = vmul.f32 %v881, %v888
          %v890 = vld [vmem:[#allocation4] sm:$0x1]
          %vm891 = vcmask 647168
          %v892 = vsel %vm891, %v890, 0.0
          %893 = vadd.xlane.f32.xlu0 %v892
          %v894 = vpop.xlane.xlu0 %893
          %v895 = vrot.slane %v894, 4
          %v896 = vadd.f32 %v894, %v895
          %v897 = vrot.slane %v896, 2
          %v898 = vadd.f32 %v896, %v897
          %v899 = vrot.slane %v898, 1
          %v900 = vadd.f32 %v898, %v899
          %s901 = vtos %v900
          %v902 = vstv %s901
          %v903 = vld [vmem:[#allocation5] sm:$0x1]
          %v904 = vsel %vm891, %v903, 0.0
          %905 = vadd.xlane.f32.xlu0 %v904
          %v906 = vpop.xlane.xlu0 %905
          %v907 = vrot.slane %v906, 4
          %v908 = vadd.f32 %v906, %v907
          %v909 = vrot.slane %v908, 2
          %v910 = vadd.f32 %v908, %v909
          %v911 = vrot.slane %v910, 1
          %v912 = vadd.f32 %v910, %v911
          %s913 = vtos %v912
          %v914 = vstv %s913
          %v915 = vadd.f32 %v902, %v914
          %v916 = vrcp.pop 176.0
          %v917 = vmul.f32 176.0, %v916
          %v918 = vsub.f32 1.0, %v917
          %v919 = vmul.f32 %v916, %v918
          %v920 = vadd.f32 %v916, %v919
          %vm921 = vweird.f32 %v916
          %v922 = vsel %vm921, %v916, %v920
          %v923 = vmul.f32 %v915, %v922
          %v924 = vrcp.pop 8.0
          %v925 = vmul.f32 8.0, %v924
          %v926 = vsub.f32 1.0, %v925
          %v927 = vmul.f32 %v924, %v926
          %v928 = vadd.f32 %v924, %v927
          %vm929 = vweird.f32 %v924
          %v930 = vsel %vm929, %v924, %v928
          %v931 = vmul.f32 %v923, %v930
          %v932 = vadd.f32 %v889, %v931
          %933 = vst.msk [vmem:[#allocation8] sm:$0x1] %vm808, %v932
          %v934 = vld [vmem:[%s3] sm:$0xff]
          %v935 = vld [vmem:[%s3 + $0x8] sm:$0xff]
          %v936 = vld [vmem:[%s4] sm:$0xff]
          %v937 = vld [vmem:[%s4 + $0x8] sm:$0xff]
          %v938 = vsub.f32 %v934, %v936
          %v939 = vsub.f32 %v935, %v937
          %v940 = vmul.f32 %v938, %v938
          %v941 = vmul.f32 %v939, %v939
          %v942 = vsel %vm352, %v940, 0.0
          %943 = vadd.xlane.f32.xlu0 %v942
          %v944 = vpop.xlane.xlu0 %943
          %v945 = vsel %vm352, %v941, 0.0
          %946 = vadd.xlane.f32.xlu0 %v945
          %v947 = vpop.xlane.xlu0 %946
          %v948 = vrsqrt.pop %v944
          %v949 = vmul.f32 %v948, %v944
          %v950 = vmul.f32 %v949, %v948
          %v951 = vmul.f32 0.5, %v950
          %v952 = vsub.f32 1.5, %v951
          %v953 = vmul.f32 %v948, %v952
          %v954 = vmul.f32 %v944, %v953
          %vm955 = vcmp.eq.f32.partialorder %v944, inf
          %v956 = vsel %vm955, %v944, %v954
          %vm957 = vcmp.eq.f32.partialorder %v944, 0.0
          %v958 = vand.u32 %v944, 2147483648
          %v959 = vsel %vm957, %v958, %v956
          %v960 = vrsqrt.pop %v947
          %v961 = vmul.f32 %v960, %v947
          %v962 = vmul.f32 %v961, %v960
          %v963 = vmul.f32 0.5, %v962
          %v964 = vsub.f32 1.5, %v963
          %v965 = vmul.f32 %v960, %v964
          %v966 = vmul.f32 %v947, %v965
          %vm967 = vcmp.eq.f32.partialorder %v947, inf
          %v968 = vsel %vm967, %v947, %v966
          %vm969 = vcmp.eq.f32.partialorder %v947, 0.0
          %v970 = vand.u32 %v947, 2147483648
          %v971 = vsel %vm969, %v970, %v968
          %v972 = vsel %vm784, %v959, 0.0
          %v973 = vsel %vm784, %v971, 0.0
          %v974 = vadd.f32 %v972, %v973
          %975 = vadd.xlane.f32.xlu0 %v974
          %v976 = vpop.xlane.xlu0 %975
          %v977 = vrot.slane %v976, 4
          %v978 = vadd.f32 %v976, %v977
          %v979 = vrot.slane %v978, 2
          %v980 = vadd.f32 %v978, %v979
          %v981 = vrot.slane %v980, 1
          %v982 = vadd.f32 %v980, %v981
          %s983 = vtos %v982
          %v984 = vstv %s983
          %v985 = vrcp.pop 16.0
          %v986 = vmul.f32 16.0, %v985
          %v987 = vsub.f32 1.0, %v986
          %v988 = vmul.f32 %v985, %v987
          %v989 = vadd.f32 %v985, %v988
          %vm990 = vweird.f32 %v985
          %v991 = vsel %vm990, %v985, %v989
          %v992 = vmul.f32 %v984, %v991
          %993 = vst.msk [vmem:[#allocation10] sm:$0x1] %vm808, %v992
        $region56: #{clustering_module_forward.1} parent=39 // pred_fallthru
          _
        // Predicated region
        $region57: #{clustering_module_forward.1} parent=39 // pred_check
          %p994 = pneg %p159
        $region58: #{clustering_module_forward.1} parent=39 // pred_check_branch
          %996 = sbr.rel (%p994) target = $region60
        $region59: #{clustering_module_forward.1} parent=39 // pred_region
          %998 = vsyncadd [#allocation7], 0
          %s1000 = sshll.u32 [#allocation6], 4
          %s1001 = int_to_ptr.vmem [resolvable:$true] %s1000
          %s1002 = sshll.u32 %s5, 4
          %s1003 = int_to_ptr.hbm [resolvable:$true] %s1002
          %1005 = dma.vmem_to_hbm [thread:$0]  %s1001, 16, %s1003, [#allocation7]
        $region60: #{clustering_module_forward.1} parent=39 // pred_fallthru
          _
        // Predicated region
        $region61: #{clustering_module_forward.1} parent=39 // pred_check
          %p1006 = pneg %p180
        $region62: #{clustering_module_forward.1} parent=39 // pred_check_branch
          %1008 = sbr.rel (%p1006) target = $region64
        $region63: #{clustering_module_forward.1} parent=39 // pred_region
          %1010 = vsyncadd [#allocation9], 0
          %s1012 = sshll.u32 [#allocation8], 4
          %s1013 = int_to_ptr.vmem [resolvable:$true] %s1012
          %s1014 = sshll.u32 %s6, 4
          %s1015 = int_to_ptr.hbm [resolvable:$true] %s1014
          %1017 = dma.vmem_to_hbm [thread:$0]  %s1013, 16, %s1015, [#allocation9]
        $region64: #{clustering_module_forward.1} parent=39 // pred_fallthru
          _
        // Predicated region
        $region65: #{clustering_module_forward.1} parent=39 // pred_check
          %p1018 = pneg %p201
        $region66: #{clustering_module_forward.1} parent=39 // pred_check_branch
          %1020 = sbr.rel (%p1018) target = $region68
        $region67: #{clustering_module_forward.1} parent=39 // pred_region
          %1022 = vsyncadd [#allocation9], 0
          %s1024 = sshll.u32 [#allocation10], 4
          %s1025 = int_to_ptr.vmem [resolvable:$true] %s1024
          %s1026 = sshll.u32 %s7, 4
          %s1027 = int_to_ptr.hbm [resolvable:$true] %s1026
          %1029 = dma.vmem_to_hbm [thread:$0]  %s1025, 16, %s1027, [#allocation9]
        $region68: #{clustering_module_forward.1} parent=39 // pred_fallthru
          _
        // Predicated region
        $region69: #{clustering_module_forward.1} parent=39 // pred_check
          %p1030 = pneg %p159
        $region70: #{clustering_module_forward.1} parent=39 // pred_check_branch
          %1032 = sbr.rel (%p1030) target = $region72
        $region71: #{clustering_module_forward.1} parent=39 // pred_region
          %1034 = dma.done [#allocation7], 16
        $region72: #{clustering_module_forward.1} parent=39 // pred_fallthru
          _
        // Predicated region
        $region73: #{clustering_module_forward.1} parent=39 // pred_check
          %p1035 = pneg %p180
        $region74: #{clustering_module_forward.1} parent=39 // pred_check_branch
          %1037 = sbr.rel (%p1035) target = $region76
        $region75: #{clustering_module_forward.1} parent=39 // pred_region
          %1039 = dma.done [#allocation9], 16
        $region76: #{clustering_module_forward.1} parent=39 // pred_fallthru
          _
        // Predicated region
        $region77: #{clustering_module_forward.1} parent=39 // pred_check
          %p1040 = pneg %p201
        $region78: #{clustering_module_forward.1} parent=39 // pred_check_branch
          %1042 = sbr.rel (%p1040) target = $region80
        $region79: #{clustering_module_forward.1} parent=39 // pred_region
          %1044 = dma.done [#allocation9], 16
        $region80: #{clustering_module_forward.1} parent=39 // pred_fallthru
          _
      $region40: #{clustering_module_forward.1} parent=5 // pred_fallthru
        _
      %p1045 = scmp.le.s32.totalorder 2, %s16
      // Predicated region
      $region81: #{clustering_module_forward.1} parent=5 // pred_check
        %p1046 = pneg %p1045
      $region82: #{clustering_module_forward.1} parent=5 // pred_check_branch
        %1048 = sbr.rel (%p1046) target = $region84
      $region83: #{clustering_module_forward.1} parent=5 // pred_region
        %s1049 = ssub.s32 %s16, 2
      $region84: #{clustering_module_forward.1} parent=5 // pred_fallthru
        _
    $region6: #{clustering_module_forward.1} parent=1 // loop_footer
      %s20 = sadd.s32 1, %s16
    $region7: #{clustering_module_forward.1} parent=1 // loop_footer_branch
      %15 = sbr.rel target = $region3
    $region8: #{clustering_module_forward.1} parent=1 // loop_exit
      _
    %1050 = vsyncpa [#allocation7], 1
    %s1051 = scalar_lea.sflag [#allocation7], 1
    %1052 = vsyncpa %s1051, 1
    %1053 = vsyncpa [#allocation9], 1

</llo_original>
